<compile_context>
chip_gen: v7x
topology: tpu7x:2x2x1
jax: 0.10.0
libtpu: 0.0.40
codegen_flags: <defaults>
</compile_context>

<pallas_src>
import numpy as np
import jax
import jax.numpy as jnp
from jax import lax
from jax.experimental import pallas as pl
from jax.experimental.pallas import tpu as pltpu

# ---- SineGen hyper-parameters (module __init__ args; no learnable weights) ----
SAMP_RATE = 24000
HARMONIC_NUM = 8
DIM = HARMONIC_NUM + 1          # fundamental + overtones
SINE_AMP = 0.1
NOISE_STD = 0.003
VOICED_THRESHOLD = 0.0


def _round_up(x, m):
    return (x + m - 1) // m * m


def _make_sinegen_kernel(emit_noise):
    """Kernel factory: emit_noise selects whether the third output (noise) is written."""

    def kernel(cr_ref, sr_ref, sp_ref,         # scalar prefetch (SMEM): cos/sin(2*pi*rand_ini), start phases
               f0_ref, randn_ref,              # VMEM inputs
               *out_refs):                     # VMEM outputs
        if emit_noise:
            sine_ref, uv_ref, noise_ref = out_refs
        else:
            sine_ref, uv_ref = out_refs
            noise_ref = None

        b = pl.program_id(0)
        j = pl.program_id(1)
        r_blk = f0_ref.shape[1]                # rows of 128 samples in this time tile

        f0 = f0_ref[0]                         # (R, 128)
        rad = f0 * (1.0 / SAMP_RATE)           # fundamental phase increment per sample

        # ---- two-level in-tile inclusive cumsum (O(lt) MXU work, constant-size tris) ----
        row = lax.broadcasted_iota(jnp.int32, (128, 128), 0)
        col = lax.broadcasted_iota(jnp.int32, (128, 128), 1)
        tri = (row <= col).astype(jnp.float32)                      # tri[s, t] = 1 for s <= t
        csum = jnp.dot(rad, tri, preferred_element_type=jnp.float32,
                       precision=lax.Precision.HIGHEST)             # (R, 128) in-row cumsum

        rowtot = jnp.sum(rad, axis=1, keepdims=True)                # (R, 1) per-row totals
        rr = lax.broadcasted_iota(jnp.int32, (r_blk, r_blk), 0)
        cc = lax.broadcasted_iota(jnp.int32, (r_blk, r_blk), 1)
        ltri = (cc < rr).astype(jnp.float32)                        # strictly lower triangular
        offs = jnp.dot(ltri, jnp.broadcast_to(rowtot, (r_blk, 128)),
                       preferred_element_type=jnp.float32,
                       precision=lax.Precision.HIGHEST)             # offs[r, :] = sum_{q<r} rowtot[q]

        # running fundamental phase (cycles); start phase precomputed per (batch, tile)
        phi = sp_ref[b, j] + offs + csum                            # (R, 128)
        frac_phi = jnp.mod(phi, 1.0)                                # keep sin args small

        two_pi = 2.0 * np.pi
        s1 = jnp.sin(frac_phi * two_pi)                             # sin(2*pi*phi)
        c1 = jnp.cos(frac_phi * two_pi)                             # cos(2*pi*phi)

        # voiced/unvoiced mask and noise amplitude
        uv = (f0 > VOICED_THRESHOLD).astype(jnp.float32)            # (R, 128)
        uv_ref[0, 0] = uv
        sine_scale = uv * SINE_AMP
        noise_amp = uv * NOISE_STD + (1.0 - uv) * (SINE_AMP / 3.0)

        # harmonics k = 1..DIM via angle-addition recurrence (VPU), rand_ini folded via
        # per-(batch, harmonic) sin/cos constants from SMEM:
        #   sin(2*pi*(k*phi + r_k)) = sin(2*pi*k*phi)*cos(2*pi*r_k) + cos(2*pi*k*phi)*sin(2*pi*r_k)
        sk, ck = s1, c1
        for k in range(DIM):
            if k > 0:
                sk, ck = sk * c1 + ck * s1, ck * c1 - sk * s1       # harmonic k+1 from harmonic k
            cr = cr_ref[b, k]
            sr = sr_ref[b, k]
            s_fold = sk * cr + ck * sr
            nk = noise_amp * randn_ref[0, k]
            sine_ref[0, k] = s_fold * sine_scale + nk               # sine_waves = sines*amp*uv + noise
            if emit_noise:
                noise_ref[0, k] = nk

    return kernel


def sine_gen(f0, key, *, lt=4096, channels_last=False, return_noise=True):
    """SineGen.forward (flag_for_pulse=False path).

    f0: (B, L, 1) float32 (PyTorch convention; f0 == 0 for unvoiced frames).

    Returns (sine_waves, uv, noise) [noise omitted if return_noise=False].
    Default layout is channel-first: sine (B, DIM, L), uv (B, 1, L), noise (B, DIM, L)
    (lane-dense, what the downstream Conv1d wants).  channels_last=True gives the exact
    PyTorch layouts (B, L, DIM) / (B, L, 1).
    """
    B, L, _ = f0.shape
    k1, k2 = jax.random.split(key)

    # random initial phase per (batch, harmonic); fundamental gets 0 (PyTorch rand_ini)
    rand_ini = jax.random.uniform(k1, (B, DIM), jnp.float32)
    rand_ini = rand_ini.at[:, 0].set(0.0)
    cos_rini = jnp.cos((2.0 * np.pi) * rand_ini)                    # (B, DIM) fold constants
    sin_rini = jnp.sin((2.0 * np.pi) * rand_ini)

    # time tiling: tiles of lt samples = R rows of 128 lanes (R kept a multiple of 8)
    lt = max(1024, _round_up(int(lt), 1024))
    lt = min(lt, _round_up(max(L, 1), 1024))
    n_t = -(-L // lt)
    Lp = n_t * lt
    R = lt // 128
    Rt = Lp // 128

    f0_flat = jnp.reshape(f0, (B, L))
    if Lp != L:
        f0_flat = jnp.pad(f0_flat, ((0, 0), (0, Lp - L)))
    f0_tiles = f0_flat.reshape(B, Rt, 128)

    # Per-(batch, tile) starting phase = frac(exclusive scan of per-tile phase totals).
    # Cheap XLA work over (B, n_t); removes the sequential carry so both grid axes are parallel.
    tile_tot = jnp.sum(f0_flat.reshape(B, n_t, lt), axis=-1) * (1.0 / SAMP_RATE)
    start_phase = jnp.mod(jnp.cumsum(tile_tot, axis=-1) - tile_tot, 1.0).astype(jnp.float32)

    # Standard-normal noise, generated in the wrapper (portable; see TODO at top of file).
    randn = jax.random.normal(k2, (B, DIM, Lp), jnp.float32)
    randn_tiles = randn.reshape(B, DIM, Rt, 128)

    in_specs = [
        pl.BlockSpec((1, R, 128), lambda b, j, cr, sr, sp: (b, j, 0)),          # f0
        pl.BlockSpec((1, DIM, R, 128), lambda b, j, cr, sr, sp: (b, 0, j, 0)),  # randn
    ]
    out_shape = [jax.ShapeDtypeStruct((B, DIM, Rt, 128), jnp.float32),          # sine_waves
                 jax.ShapeDtypeStruct((B, 1, Rt, 128), jnp.float32)]            # uv
    out_specs = [pl.BlockSpec((1, DIM, R, 128), lambda b, j, cr, sr, sp: (b, 0, j, 0)),
                 pl.BlockSpec((1, 1, R, 128), lambda b, j, cr, sr, sp: (b, 0, j, 0))]
    if return_noise:
        out_shape.append(jax.ShapeDtypeStruct((B, DIM, Rt, 128), jnp.float32))  # noise
        out_specs.append(pl.BlockSpec((1, DIM, R, 128), lambda b, j, cr, sr, sp: (b, 0, j, 0)))

    outs = pl.pallas_call(
        _make_sinegen_kernel(return_noise),
        out_shape=tuple(out_shape),
        grid_spec=pltpu.PrefetchScalarGridSpec(
            num_scalar_prefetch=3,
            grid=(B, n_t),
            in_specs=in_specs,
            out_specs=out_specs,
        ),
        compiler_params=pltpu.CompilerParams(
            dimension_semantics=("parallel", "parallel")),
    )(cos_rini, sin_rini, start_phase, f0_tiles, randn_tiles)

    def _finish(x):   # (B, C, Rt, 128) -> (B, C, L) [-> (B, L, C) if channels_last]
        x = x.reshape(B, x.shape[1], Lp)[:, :, :L]
        return jnp.transpose(x, (0, 2, 1)) if channels_last else x

    sine_waves = _finish(outs[0])
    uv = _finish(outs[1])
    if return_noise:
        return sine_waves, uv, _finish(outs[2])
    return sine_waves, uv


if __name__ == "__main__":
    key = jax.random.PRNGKey(0)
    kf, kv, kn = jax.random.split(key, 3)

    B, L = 2, 1000   # exercises tail padding (1000 -> one 1024-sample tile)
    # f0 in Hz with some unvoiced (zero) frames
    f0 = jax.random.uniform(kf, (B, L, 1), jnp.float32, minval=80.0, maxval=400.0)
    voiced = (jax.random.uniform(kv, (B, L, 1)) > 0.3).astype(jnp.float32)
    f0 = f0 * voiced

    sine_waves, uv, noise = jax.jit(sine_gen)(f0, kn)
    jax.block_until_ready((sine_waves, uv, noise))

    assert sine_waves.shape == (B, DIM, L)
    assert uv.shape == (B, 1, L)
    assert noise.shape == (B, DIM, L)
    assert bool(jnp.all(jnp.isfinite(sine_waves)))

    # uv must be exactly (f0 > 0)
    exp_uv = (f0[..., 0] > VOICED_THRESHOLD).astype(jnp.float32)[:, None, :]
    assert bool(jnp.all(uv == exp_uv))

    # Numerical check of the deterministic part against a pure-JAX port of the PyTorch math
    # (sine_waves - noise == sin(2*pi*(k*cumsum(f0/sr) + rand_ini_k)) * sine_amp * uv).
    k1_chk, _ = jax.random.split(kn)
    rand_ini_chk = jax.random.uniform(k1_chk, (B, DIM), jnp.float32).at[:, 0].set(0.0)
    harm = jnp.arange(1, DIM + 1, dtype=jnp.float32)
    phi_ref = jnp.cumsum(f0[..., 0] / SAMP_RATE, axis=1)                       # (B, L)
    phase_ref = phi_ref[:, None, :] * harm[None, :, None] + rand_ini_chk[:, :, None]
    ref = jnp.sin(2.0 * np.pi * phase_ref) * SINE_AMP * uv                     # (B, DIM, L)
    err = float(jnp.max(jnp.abs((sine_waves - noise) - ref)))
    assert err < 5e-3, f"max abs error vs reference: {err}"

    print("KERNEL_OK")
</pallas_src>

<mosaic_0001>
module attributes {stable_mosaic.version = 11 : i64} {
  func.func @kernel(%arg0: i32, %arg1: i32, %arg2: memref<2x9xf32, #tpu.memory_space<smem>>, %arg3: memref<2x9xf32, #tpu.memory_space<smem>>, %arg4: memref<2x1xf32, #tpu.memory_space<smem>>, %arg5: memref<1x8x128xf32, #tpu.memory_space<vmem>>, %arg6: memref<1x9x8x128xf32, #tpu.memory_space<vmem>>, %arg7: memref<1x9x8x128xf32, #tpu.memory_space<vmem>>, %arg8: memref<1x1x8x128xf32, #tpu.memory_space<vmem>>, %arg9: memref<1x9x8x128xf32, #tpu.memory_space<vmem>>) attributes {dimension_semantics = [#tpu.dimension_semantics<parallel>, #tpu.dimension_semantics<parallel>], iteration_bounds = array<i64: 2, 1>, scalar_prefetch = 3 : i64, scratch_operands = 0 : i64, tpu.core_type = #tpu.core_type<tc>, window_params = [{transform_indices = @transform_0, window_bounds = array<i64: 1, 8, 128>}, {transform_indices = @transform_1, window_bounds = array<i64: 1, 9, 8, 128>}, {transform_indices = @transform_2, window_bounds = array<i64: 1, 9, 8, 128>}, {transform_indices = @transform_3, window_bounds = array<i64: 1, 1, 8, 128>}, {transform_indices = @transform_4, window_bounds = array<i64: 1, 9, 8, 128>}]} {
    %c0 = arith.constant 0 : index
    %c0_0 = arith.constant 0 : index
    %c0_1 = arith.constant 0 : index
    %0 = vector.load %arg5[%c0, %c0_0, %c0_1] : memref<1x8x128xf32, #tpu.memory_space<vmem>>, vector<1x8x128xf32>
    %1 = vector.shape_cast %0 : vector<1x8x128xf32> to vector<8x128xf32>
    %cst = arith.constant 4.16666662E-5 : f32
    %2 = vector.broadcast %cst : f32 to vector<8x128xf32>
    %3 = arith.mulf %1, %2 : vector<8x128xf32>
    %4 = tpu.iota {dimensions = array<i32: 0>} : vector<128x128xi32>
    %5 = tpu.iota {dimensions = array<i32: 1>} : vector<128x128xi32>
    %6 = arith.cmpi sle, %4, %5 : vector<128x128xi32>
    %7 = arith.extui %6 : vector<128x128xi1> to vector<128x128xi32>
    %8 = arith.sitofp %7 : vector<128x128xi32> to vector<128x128xf32>
    %cst_2 = arith.constant dense<0.000000e+00> : vector<8x128xf32>
    %9 = tpu.matmul %3, %8, %cst_2 {dimension_numbers = #tpu.dot_dimension_numbers<[1], [0], [0], [1], [0, 0, 1, 1], [], []>, precision = #tpu.contract_precision<fp32>} : vector<8x128xf32>, vector<128x128xf32>, vector<8x128xf32> -> vector<8x128xf32>
    %cst_3 = arith.constant dense<0.000000e+00> : vector<8xf32>
    %10 = vector.multi_reduction <add>, %3, %cst_3 [1] : vector<8x128xf32> to vector<8xf32>
    %11 = vector.shape_cast %10 : vector<8xf32> to vector<8x1xf32>
    %12 = tpu.iota {dimensions = array<i32: 0>} : vector<8x8xi32>
    %13 = tpu.iota {dimensions = array<i32: 1>} : vector<8x8xi32>
    %14 = arith.cmpi slt, %13, %12 : vector<8x8xi32>
    %15 = arith.extui %14 : vector<8x8xi1> to vector<8x8xi32>
    %16 = arith.sitofp %15 : vector<8x8xi32> to vector<8x8xf32>
    %17 = vector.shape_cast %11 : vector<8x1xf32> to vector<8x1xf32>
    %18 = vector.broadcast %17 : vector<8x1xf32> to vector<8x128xf32>
    %cst_4 = arith.constant dense<0.000000e+00> : vector<8x128xf32>
    %19 = tpu.matmul %16, %18, %cst_4 {dimension_numbers = #tpu.dot_dimension_numbers<[1], [0], [0], [1], [0, 0, 1, 1], [], []>, precision = #tpu.contract_precision<fp32>} : vector<8x8xf32>, vector<8x128xf32>, vector<8x128xf32> -> vector<8x128xf32>
    %20 = arith.index_cast %arg0 : i32 to index
    %21 = arith.index_cast %arg1 : i32 to index
    %22 = memref.load %arg4[%20, %21] : memref<2x1xf32, #tpu.memory_space<smem>>
    %23 = vector.broadcast %22 : f32 to vector<8x128xf32>
    %24 = arith.addf %23, %19 : vector<8x128xf32>
    %25 = arith.addf %24, %9 : vector<8x128xf32>
    %cst_5 = arith.constant 1.000000e+00 : f32
    %26 = vector.broadcast %cst_5 : f32 to vector<8x128xf32>
    %27 = arith.remf %25, %26 : vector<8x128xf32>
    %cst_6 = arith.constant 0.000000e+00 : f32
    %28 = vector.broadcast %cst_6 : f32 to vector<8x128xf32>
    %29 = arith.cmpf one, %27, %28 : vector<8x128xf32>
    %cst_7 = arith.constant 0.000000e+00 : f32
    %30 = vector.broadcast %cst_7 : f32 to vector<8x128xf32>
    %31 = arith.cmpf olt, %27, %30 : vector<8x128xf32>
    %cst_8 = arith.constant 0.000000e+00 : f32
    %32 = arith.cmpf olt, %cst_5, %cst_8 : f32
    %33 = vector.broadcast %32 : i1 to vector<8x128xi1>
    %34 = vector.broadcast %33 : vector<8x128xi1> to vector<8x128xi1>
    %35 = arith.xori %31, %34 : vector<8x128xi1>
    %36 = arith.andi %35, %29 : vector<8x128xi1>
    %37 = vector.broadcast %cst_5 : f32 to vector<8x128xf32>
    %38 = arith.addf %27, %37 : vector<8x128xf32>
    %39 = arith.select %36, %38, %27 : vector<8x128xi1>, vector<8x128xf32>
    %cst_9 = arith.constant 6.28318548 : f32
    %40 = vector.broadcast %cst_9 : f32 to vector<8x128xf32>
    %41 = arith.mulf %39, %40 : vector<8x128xf32>
    %42 = math.sin %41 : vector<8x128xf32>
    %cst_10 = arith.constant 6.28318548 : f32
    %43 = vector.broadcast %cst_10 : f32 to vector<8x128xf32>
    %44 = arith.mulf %39, %43 : vector<8x128xf32>
    %45 = math.cos %44 : vector<8x128xf32>
    %cst_11 = arith.constant 0.000000e+00 : f32
    %46 = vector.broadcast %cst_11 : f32 to vector<8x128xf32>
    %47 = arith.cmpf ogt, %1, %46 : vector<8x128xf32>
    %48 = arith.extui %47 : vector<8x128xi1> to vector<8x128xi32>
    %49 = arith.sitofp %48 : vector<8x128xi32> to vector<8x128xf32>
    %c0_12 = arith.constant 0 : index
    %c0_13 = arith.constant 0 : index
    %c0_14 = arith.constant 0 : index
    %c0_15 = arith.constant 0 : index
    %50 = vector.load %arg8[%c0_12, %c0_13, %c0_14, %c0_15] : memref<1x1x8x128xf32, #tpu.memory_space<vmem>>, vector<1x1x8x128xf32>
    %51 = vector.shape_cast %50 : vector<1x1x8x128xf32> to vector<8x128xf32>
    %52 = vector.shape_cast %49 : vector<8x128xf32> to vector<1x1x8x128xf32>
    tpu.vector_store %arg8[%c0_12, %c0_13, %c0_14, %c0_15], %52 {strides = array<i32>} : memref<1x1x8x128xf32, #tpu.memory_space<vmem>>, vector<1x1x8x128xf32>,
    %cst_16 = arith.constant 1.000000e-01 : f32
    %53 = vector.broadcast %cst_16 : f32 to vector<8x128xf32>
    %54 = arith.mulf %49, %53 : vector<8x128xf32>
    %cst_17 = arith.constant 3.000000e-03 : f32
    %55 = vector.broadcast %cst_17 : f32 to vector<8x128xf32>
    %56 = arith.mulf %49, %55 : vector<8x128xf32>
    %cst_18 = arith.constant 1.000000e+00 : f32
    %57 = vector.broadcast %cst_18 : f32 to vector<8x128xf32>
    %58 = arith.subf %57, %49 : vector<8x128xf32>
    %cst_19 = arith.constant 0.0333333351 : f32
    %59 = vector.broadcast %cst_19 : f32 to vector<8x128xf32>
    %60 = arith.mulf %58, %59 : vector<8x128xf32>
    %61 = arith.addf %56, %60 : vector<8x128xf32>
    %62 = arith.index_cast %arg0 : i32 to index
    %c0_20 = arith.constant 0 : index
    %63 = memref.load %arg2[%62, %c0_20] : memref<2x9xf32, #tpu.memory_space<smem>>
    %64 = arith.index_cast %arg0 : i32 to index
    %c0_21 = arith.constant 0 : index
    %65 = memref.load %arg3[%64, %c0_21] : memref<2x9xf32, #tpu.memory_space<smem>>
    %66 = vector.broadcast %63 : f32 to vector<8x128xf32>
    %67 = arith.mulf %42, %66 : vector<8x128xf32>
    %68 = vector.broadcast %65 : f32 to vector<8x128xf32>
    %69 = arith.mulf %45, %68 : vector<8x128xf32>
    %70 = arith.addf %67, %69 : vector<8x128xf32>
    %c0_22 = arith.constant 0 : index
    %c0_23 = arith.constant 0 : index
    %c0_24 = arith.constant 0 : index
    %c0_25 = arith.constant 0 : index
    %71 = vector.load %arg6[%c0_22, %c0_23, %c0_24, %c0_25] : memref<1x9x8x128xf32, #tpu.memory_space<vmem>>, vector<1x1x8x128xf32>
    %72 = vector.shape_cast %71 : vector<1x1x8x128xf32> to vector<8x128xf32>
    %73 = arith.mulf %61, %72 : vector<8x128xf32>
    %74 = arith.mulf %70, %54 : vector<8x128xf32>
    %75 = arith.addf %74, %73 : vector<8x128xf32>
    %c0_26 = arith.constant 0 : index
    %c0_27 = arith.constant 0 : index
    %c0_28 = arith.constant 0 : index
    %c0_29 = arith.constant 0 : index
    %76 = vector.load %arg7[%c0_26, %c0_27, %c0_28, %c0_29] : memref<1x9x8x128xf32, #tpu.memory_space<vmem>>, vector<1x1x8x128xf32>
    %77 = vector.shape_cast %76 : vector<1x1x8x128xf32> to vector<8x128xf32>
    %78 = vector.shape_cast %75 : vector<8x128xf32> to vector<1x1x8x128xf32>
    tpu.vector_store %arg7[%c0_26, %c0_27, %c0_28, %c0_29], %78 {strides = array<i32>} : memref<1x9x8x128xf32, #tpu.memory_space<vmem>>, vector<1x1x8x128xf32>,
    %c0_30 = arith.constant 0 : index
    %c0_31 = arith.constant 0 : index
    %c0_32 = arith.constant 0 : index
    %c0_33 = arith.constant 0 : index
    %79 = vector.load %arg9[%c0_30, %c0_31, %c0_32, %c0_33] : memref<1x9x8x128xf32, #tpu.memory_space<vmem>>, vector<1x1x8x128xf32>
    %80 = vector.shape_cast %79 : vector<1x1x8x128xf32> to vector<8x128xf32>
    %81 = vector.shape_cast %73 : vector<8x128xf32> to vector<1x1x8x128xf32>
    tpu.vector_store %arg9[%c0_30, %c0_31, %c0_32, %c0_33], %81 {strides = array<i32>} : memref<1x9x8x128xf32, #tpu.memory_space<vmem>>, vector<1x1x8x128xf32>,
    %82 = arith.mulf %42, %45 : vector<8x128xf32>
    %83 = arith.mulf %45, %42 : vector<8x128xf32>
    %84 = arith.addf %82, %83 : vector<8x128xf32>
    %85 = arith.mulf %45, %45 : vector<8x128xf32>
    %86 = arith.mulf %42, %42 : vector<8x128xf32>
    %87 = arith.subf %85, %86 : vector<8x128xf32>
    %88 = arith.index_cast %arg0 : i32 to index
    %c1 = arith.constant 1 : index
    %89 = memref.load %arg2[%88, %c1] : memref<2x9xf32, #tpu.memory_space<smem>>
    %90 = arith.index_cast %arg0 : i32 to index
    %c1_34 = arith.constant 1 : index
    %91 = memref.load %arg3[%90, %c1_34] : memref<2x9xf32, #tpu.memory_space<smem>>
    %92 = vector.broadcast %89 : f32 to vector<8x128xf32>
    %93 = arith.mulf %84, %92 : vector<8x128xf32>
    %94 = vector.broadcast %91 : f32 to vector<8x128xf32>
    %95 = arith.mulf %87, %94 : vector<8x128xf32>
    %96 = arith.addf %93, %95 : vector<8x128xf32>
    %c0_35 = arith.constant 0 : index
    %c1_36 = arith.constant 1 : index
    %c0_37 = arith.constant 0 : index
    %c0_38 = arith.constant 0 : index
    %97 = vector.load %arg6[%c0_35, %c1_36, %c0_37, %c0_38] : memref<1x9x8x128xf32, #tpu.memory_space<vmem>>, vector<1x1x8x128xf32>
    %98 = vector.shape_cast %97 : vector<1x1x8x128xf32> to vector<8x128xf32>
    %99 = arith.mulf %61, %98 : vector<8x128xf32>
    %100 = arith.mulf %96, %54 : vector<8x128xf32>
    %101 = arith.addf %100, %99 : vector<8x128xf32>
    %c0_39 = arith.constant 0 : index
    %c1_40 = arith.constant 1 : index
    %c0_41 = arith.constant 0 : index
    %c0_42 = arith.constant 0 : index
    %102 = vector.load %arg7[%c0_39, %c1_40, %c0_41, %c0_42] : memref<1x9x8x128xf32, #tpu.memory_space<vmem>>, vector<1x1x8x128xf32>
    %103 = vector.shape_cast %102 : vector<1x1x8x128xf32> to vector<8x128xf32>
    %104 = vector.shape_cast %101 : vector<8x128xf32> to vector<1x1x8x128xf32>
    tpu.vector_store %arg7[%c0_39, %c1_40, %c0_41, %c0_42], %104 {strides = array<i32>} : memref<1x9x8x128xf32, #tpu.memory_space<vmem>>, vector<1x1x8x128xf32>,
    %c0_43 = arith.constant 0 : index
    %c1_44 = arith.constant 1 : index
    %c0_45 = arith.constant 0 : index
    %c0_46 = arith.constant 0 : index
    %105 = vector.load %arg9[%c0_43, %c1_44, %c0_45, %c0_46] : memref<1x9x8x128xf32, #tpu.memory_space<vmem>>, vector<1x1x8x128xf32>
    %106 = vector.shape_cast %105 : vector<1x1x8x128xf32> to vector<8x128xf32>
    %107 = vector.shape_cast %99 : vector<8x128xf32> to vector<1x1x8x128xf32>
    tpu.vector_store %arg9[%c0_43, %c1_44, %c0_45, %c0_46], %107 {strides = array<i32>} : memref<1x9x8x128xf32, #tpu.memory_space<vmem>>, vector<1x1x8x128xf32>,
    %108 = arith.mulf %84, %45 : vector<8x128xf32>
    %109 = arith.mulf %87, %42 : vector<8x128xf32>
    %110 = arith.addf %108, %109 : vector<8x128xf32>
    %111 = arith.mulf %87, %45 : vector<8x128xf32>
    %112 = arith.mulf %84, %42 : vector<8x128xf32>
    %113 = arith.subf %111, %112 : vector<8x128xf32>
    %114 = arith.index_cast %arg0 : i32 to index
    %c2 = arith.constant 2 : index
    %115 = memref.load %arg2[%114, %c2] : memref<2x9xf32, #tpu.memory_space<smem>>
    %116 = arith.index_cast %arg0 : i32 to index
    %c2_47 = arith.constant 2 : index
    %117 = memref.load %arg3[%116, %c2_47] : memref<2x9xf32, #tpu.memory_space<smem>>
    %118 = vector.broadcast %115 : f32 to vector<8x128xf32>
    %119 = arith.mulf %110, %118 : vector<8x128xf32>
    %120 = vector.broadcast %117 : f32 to vector<8x128xf32>
    %121 = arith.mulf %113, %120 : vector<8x128xf32>
    %122 = arith.addf %119, %121 : vector<8x128xf32>
    %c0_48 = arith.constant 0 : index
    %c2_49 = arith.constant 2 : index
    %c0_50 = arith.constant 0 : index
    %c0_51 = arith.constant 0 : index
    %123 = vector.load %arg6[%c0_48, %c2_49, %c0_50, %c0_51] : memref<1x9x8x128xf32, #tpu.memory_space<vmem>>, vector<1x1x8x128xf32>
    %124 = vector.shape_cast %123 : vector<1x1x8x128xf32> to vector<8x128xf32>
    %125 = arith.mulf %61, %124 : vector<8x128xf32>
    %126 = arith.mulf %122, %54 : vector<8x128xf32>
    %127 = arith.addf %126, %125 : vector<8x128xf32>
    %c0_52 = arith.constant 0 : index
    %c2_53 = arith.constant 2 : index
    %c0_54 = arith.constant 0 : index
    %c0_55 = arith.constant 0 : index
    %128 = vector.load %arg7[%c0_52, %c2_53, %c0_54, %c0_55] : memref<1x9x8x128xf32, #tpu.memory_space<vmem>>, vector<1x1x8x128xf32>
    %129 = vector.shape_cast %128 : vector<1x1x8x128xf32> to vector<8x128xf32>
    %130 = vector.shape_cast %127 : vector<8x128xf32> to vector<1x1x8x128xf32>
    tpu.vector_store %arg7[%c0_52, %c2_53, %c0_54, %c0_55], %130 {strides = array<i32>} : memref<1x9x8x128xf32, #tpu.memory_space<vmem>>, vector<1x1x8x128xf32>,
    %c0_56 = arith.constant 0 : index
    %c2_57 = arith.constant 2 : index
    %c0_58 = arith.constant 0 : index
    %c0_59 = arith.constant 0 : index
    %131 = vector.load %arg9[%c0_56, %c2_57, %c0_58, %c0_59] : memref<1x9x8x128xf32, #tpu.memory_space<vmem>>, vector<1x1x8x128xf32>
    %132 = vector.shape_cast %131 : vector<1x1x8x128xf32> to vector<8x128xf32>
    %133 = vector.shape_cast %125 : vector<8x128xf32> to vector<1x1x8x128xf32>
    tpu.vector_store %arg9[%c0_56, %c2_57, %c0_58, %c0_59], %133 {strides = array<i32>} : memref<1x9x8x128xf32, #tpu.memory_space<vmem>>, vector<1x1x8x128xf32>,
    %134 = arith.mulf %110, %45 : vector<8x128xf32>
    %135 = arith.mulf %113, %42 : vector<8x128xf32>
    %136 = arith.addf %134, %135 : vector<8x128xf32>
    %137 = arith.mulf %113, %45 : vector<8x128xf32>
    %138 = arith.mulf %110, %42 : vector<8x128xf32>
    %139 = arith.subf %137, %138 : vector<8x128xf32>
    %140 = arith.index_cast %arg0 : i32 to index
    %c3 = arith.constant 3 : index
    %141 = memref.load %arg2[%140, %c3] : memref<2x9xf32, #tpu.memory_space<smem>>
    %142 = arith.index_cast %arg0 : i32 to index
    %c3_60 = arith.constant 3 : index
    %143 = memref.load %arg3[%142, %c3_60] : memref<2x9xf32, #tpu.memory_space<smem>>
    %144 = vector.broadcast %141 : f32 to vector<8x128xf32>
    %145 = arith.mulf %136, %144 : vector<8x128xf32>
    %146 = vector.broadcast %143 : f32 to vector<8x128xf32>
    %147 = arith.mulf %139, %146 : vector<8x128xf32>
    %148 = arith.addf %145, %147 : vector<8x128xf32>
    %c0_61 = arith.constant 0 : index
    %c3_62 = arith.constant 3 : index
    %c0_63 = arith.constant 0 : index
    %c0_64 = arith.constant 0 : index
    %149 = vector.load %arg6[%c0_61, %c3_62, %c0_63, %c0_64] : memref<1x9x8x128xf32, #tpu.memory_space<vmem>>, vector<1x1x8x128xf32>
    %150 = vector.shape_cast %149 : vector<1x1x8x128xf32> to vector<8x128xf32>
    %151 = arith.mulf %61, %150 : vector<8x128xf32>
    %152 = arith.mulf %148, %54 : vector<8x128xf32>
    %153 = arith.addf %152, %151 : vector<8x128xf32>
    %c0_65 = arith.constant 0 : index
    %c3_66 = arith.constant 3 : index
    %c0_67 = arith.constant 0 : index
    %c0_68 = arith.constant 0 : index
    %154 = vector.load %arg7[%c0_65, %c3_66, %c0_67, %c0_68] : memref<1x9x8x128xf32, #tpu.memory_space<vmem>>, vector<1x1x8x128xf32>
    %155 = vector.shape_cast %154 : vector<1x1x8x128xf32> to vector<8x128xf32>
    %156 = vector.shape_cast %153 : vector<8x128xf32> to vector<1x1x8x128xf32>
    tpu.vector_store %arg7[%c0_65, %c3_66, %c0_67, %c0_68], %156 {strides = array<i32>} : memref<1x9x8x128xf32, #tpu.memory_space<vmem>>, vector<1x1x8x128xf32>,
    %c0_69 = arith.constant 0 : index
    %c3_70 = arith.constant 3 : index
    %c0_71 = arith.constant 0 : index
    %c0_72 = arith.constant 0 : index
    %157 = vector.load %arg9[%c0_69, %c3_70, %c0_71, %c0_72] : memref<1x9x8x128xf32, #tpu.memory_space<vmem>>, vector<1x1x8x128xf32>
    %158 = vector.shape_cast %157 : vector<1x1x8x128xf32> to vector<8x128xf32>
    %159 = vector.shape_cast %151 : vector<8x128xf32> to vector<1x1x8x128xf32>
    tpu.vector_store %arg9[%c0_69, %c3_70, %c0_71, %c0_72], %159 {strides = array<i32>} : memref<1x9x8x128xf32, #tpu.memory_space<vmem>>, vector<1x1x8x128xf32>,
    %160 = arith.mulf %136, %45 : vector<8x128xf32>
    %161 = arith.mulf %139, %42 : vector<8x128xf32>
    %162 = arith.addf %160, %161 : vector<8x128xf32>
    %163 = arith.mulf %139, %45 : vector<8x128xf32>
    %164 = arith.mulf %136, %42 : vector<8x128xf32>
    %165 = arith.subf %163, %164 : vector<8x128xf32>
    %166 = arith.index_cast %arg0 : i32 to index
    %c4 = arith.constant 4 : index
    %167 = memref.load %arg2[%166, %c4] : memref<2x9xf32, #tpu.memory_space<smem>>
    %168 = arith.index_cast %arg0 : i32 to index
    %c4_73 = arith.constant 4 : index
    %169 = memref.load %arg3[%168, %c4_73] : memref<2x9xf32, #tpu.memory_space<smem>>
    %170 = vector.broadcast %167 : f32 to vector<8x128xf32>
    %171 = arith.mulf %162, %170 : vector<8x128xf32>
    %172 = vector.broadcast %169 : f32 to vector<8x128xf32>
    %173 = arith.mulf %165, %172 : vector<8x128xf32>
    %174 = arith.addf %171, %173 : vector<8x128xf32>
    %c0_74 = arith.constant 0 : index
    %c4_75 = arith.constant 4 : index
    %c0_76 = arith.constant 0 : index
    %c0_77 = arith.constant 0 : index
    %175 = vector.load %arg6[%c0_74, %c4_75, %c0_76, %c0_77] : memref<1x9x8x128xf32, #tpu.memory_space<vmem>>, vector<1x1x8x128xf32>
    %176 = vector.shape_cast %175 : vector<1x1x8x128xf32> to vector<8x128xf32>
    %177 = arith.mulf %61, %176 : vector<8x128xf32>
    %178 = arith.mulf %174, %54 : vector<8x128xf32>
    %179 = arith.addf %178, %177 : vector<8x128xf32>
    %c0_78 = arith.constant 0 : index
    %c4_79 = arith.constant 4 : index
    %c0_80 = arith.constant 0 : index
    %c0_81 = arith.constant 0 : index
    %180 = vector.load %arg7[%c0_78, %c4_79, %c0_80, %c0_81] : memref<1x9x8x128xf32, #tpu.memory_space<vmem>>, vector<1x1x8x128xf32>
    %181 = vector.shape_cast %180 : vector<1x1x8x128xf32> to vector<8x128xf32>
    %182 = vector.shape_cast %179 : vector<8x128xf32> to vector<1x1x8x128xf32>
    tpu.vector_store %arg7[%c0_78, %c4_79, %c0_80, %c0_81], %182 {strides = array<i32>} : memref<1x9x8x128xf32, #tpu.memory_space<vmem>>, vector<1x1x8x128xf32>,
    %c0_82 = arith.constant 0 : index
    %c4_83 = arith.constant 4 : index
    %c0_84 = arith.constant 0 : index
    %c0_85 = arith.constant 0 : index
    %183 = vector.load %arg9[%c0_82, %c4_83, %c0_84, %c0_85] : memref<1x9x8x128xf32, #tpu.memory_space<vmem>>, vector<1x1x8x128xf32>
    %184 = vector.shape_cast %183 : vector<1x1x8x128xf32> to vector<8x128xf32>
    %185 = vector.shape_cast %177 : vector<8x128xf32> to vector<1x1x8x128xf32>
    tpu.vector_store %arg9[%c0_82, %c4_83, %c0_84, %c0_85], %185 {strides = array<i32>} : memref<1x9x8x128xf32, #tpu.memory_space<vmem>>, vector<1x1x8x128xf32>,
    %186 = arith.mulf %162, %45 : vector<8x128xf32>
    %187 = arith.mulf %165, %42 : vector<8x128xf32>
    %188 = arith.addf %186, %187 : vector<8x128xf32>
    %189 = arith.mulf %165, %45 : vector<8x128xf32>
    %190 = arith.mulf %162, %42 : vector<8x128xf32>
    %191 = arith.subf %189, %190 : vector<8x128xf32>
    %192 = arith.index_cast %arg0 : i32 to index
    %c5 = arith.constant 5 : index
    %193 = memref.load %arg2[%192, %c5] : memref<2x9xf32, #tpu.memory_space<smem>>
    %194 = arith.index_cast %arg0 : i32 to index
    %c5_86 = arith.constant 5 : index
    %195 = memref.load %arg3[%194, %c5_86] : memref<2x9xf32, #tpu.memory_space<smem>>
    %196 = vector.broadcast %193 : f32 to vector<8x128xf32>
    %197 = arith.mulf %188, %196 : vector<8x128xf32>
    %198 = vector.broadcast %195 : f32 to vector<8x128xf32>
    %199 = arith.mulf %191, %198 : vector<8x128xf32>
    %200 = arith.addf %197, %199 : vector<8x128xf32>
    %c0_87 = arith.constant 0 : index
    %c5_88 = arith.constant 5 : index
    %c0_89 = arith.constant 0 : index
    %c0_90 = arith.constant 0 : index
    %201 = vector.load %arg6[%c0_87, %c5_88, %c0_89, %c0_90] : memref<1x9x8x128xf32, #tpu.memory_space<vmem>>, vector<1x1x8x128xf32>
    %202 = vector.shape_cast %201 : vector<1x1x8x128xf32> to vector<8x128xf32>
    %203 = arith.mulf %61, %202 : vector<8x128xf32>
    %204 = arith.mulf %200, %54 : vector<8x128xf32>
    %205 = arith.addf %204, %203 : vector<8x128xf32>
    %c0_91 = arith.constant 0 : index
    %c5_92 = arith.constant 5 : index
    %c0_93 = arith.constant 0 : index
    %c0_94 = arith.constant 0 : index
    %206 = vector.load %arg7[%c0_91, %c5_92, %c0_93, %c0_94] : memref<1x9x8x128xf32, #tpu.memory_space<vmem>>, vector<1x1x8x128xf32>
    %207 = vector.shape_cast %206 : vector<1x1x8x128xf32> to vector<8x128xf32>
    %208 = vector.shape_cast %205 : vector<8x128xf32> to vector<1x1x8x128xf32>
    tpu.vector_store %arg7[%c0_91, %c5_92, %c0_93, %c0_94], %208 {strides = array<i32>} : memref<1x9x8x128xf32, #tpu.memory_space<vmem>>, vector<1x1x8x128xf32>,
    %c0_95 = arith.constant 0 : index
    %c5_96 = arith.constant 5 : index
    %c0_97 = arith.constant 0 : index
    %c0_98 = arith.constant 0 : index
    %209 = vector.load %arg9[%c0_95, %c5_96, %c0_97, %c0_98] : memref<1x9x8x128xf32, #tpu.memory_space<vmem>>, vector<1x1x8x128xf32>
    %210 = vector.shape_cast %209 : vector<1x1x8x128xf32> to vector<8x128xf32>
    %211 = vector.shape_cast %203 : vector<8x128xf32> to vector<1x1x8x128xf32>
    tpu.vector_store %arg9[%c0_95, %c5_96, %c0_97, %c0_98], %211 {strides = array<i32>} : memref<1x9x8x128xf32, #tpu.memory_space<vmem>>, vector<1x1x8x128xf32>,
    %212 = arith.mulf %188, %45 : vector<8x128xf32>
    %213 = arith.mulf %191, %42 : vector<8x128xf32>
    %214 = arith.addf %212, %213 : vector<8x128xf32>
    %215 = arith.mulf %191, %45 : vector<8x128xf32>
    %216 = arith.mulf %188, %42 : vector<8x128xf32>
    %217 = arith.subf %215, %216 : vector<8x128xf32>
    %218 = arith.index_cast %arg0 : i32 to index
    %c6 = arith.constant 6 : index
    %219 = memref.load %arg2[%218, %c6] : memref<2x9xf32, #tpu.memory_space<smem>>
    %220 = arith.index_cast %arg0 : i32 to index
    %c6_99 = arith.constant 6 : index
    %221 = memref.load %arg3[%220, %c6_99] : memref<2x9xf32, #tpu.memory_space<smem>>
    %222 = vector.broadcast %219 : f32 to vector<8x128xf32>
    %223 = arith.mulf %214, %222 : vector<8x128xf32>
    %224 = vector.broadcast %221 : f32 to vector<8x128xf32>
    %225 = arith.mulf %217, %224 : vector<8x128xf32>
    %226 = arith.addf %223, %225 : vector<8x128xf32>
    %c0_100 = arith.constant 0 : index
    %c6_101 = arith.constant 6 : index
    %c0_102 = arith.constant 0 : index
    %c0_103 = arith.constant 0 : index
    %227 = vector.load %arg6[%c0_100, %c6_101, %c0_102, %c0_103] : memref<1x9x8x128xf32, #tpu.memory_space<vmem>>, vector<1x1x8x128xf32>
    %228 = vector.shape_cast %227 : vector<1x1x8x128xf32> to vector<8x128xf32>
    %229 = arith.mulf %61, %228 : vector<8x128xf32>
    %230 = arith.mulf %226, %54 : vector<8x128xf32>
    %231 = arith.addf %230, %229 : vector<8x128xf32>
    %c0_104 = arith.constant 0 : index
    %c6_105 = arith.constant 6 : index
    %c0_106 = arith.constant 0 : index
    %c0_107 = arith.constant 0 : index
    %232 = vector.load %arg7[%c0_104, %c6_105, %c0_106, %c0_107] : memref<1x9x8x128xf32, #tpu.memory_space<vmem>>, vector<1x1x8x128xf32>
    %233 = vector.shape_cast %232 : vector<1x1x8x128xf32> to vector<8x128xf32>
    %234 = vector.shape_cast %231 : vector<8x128xf32> to vector<1x1x8x128xf32>
    tpu.vector_store %arg7[%c0_104, %c6_105, %c0_106, %c0_107], %234 {strides = array<i32>} : memref<1x9x8x128xf32, #tpu.memory_space<vmem>>, vector<1x1x8x128xf32>,
    %c0_108 = arith.constant 0 : index
    %c6_109 = arith.constant 6 : index
    %c0_110 = arith.constant 0 : index
    %c0_111 = arith.constant 0 : index
    %235 = vector.load %arg9[%c0_108, %c6_109, %c0_110, %c0_111] : memref<1x9x8x128xf32, #tpu.memory_space<vmem>>, vector<1x1x8x128xf32>
    %236 = vector.shape_cast %235 : vector<1x1x8x128xf32> to vector<8x128xf32>
    %237 = vector.shape_cast %229 : vector<8x128xf32> to vector<1x1x8x128xf32>
    tpu.vector_store %arg9[%c0_108, %c6_109, %c0_110, %c0_111], %237 {strides = array<i32>} : memref<1x9x8x128xf32, #tpu.memory_space<vmem>>, vector<1x1x8x128xf32>,
    %238 = arith.mulf %214, %45 : vector<8x128xf32>
    %239 = arith.mulf %217, %42 : vector<8x128xf32>
    %240 = arith.addf %238, %239 : vector<8x128xf32>
    %241 = arith.mulf %217, %45 : vector<8x128xf32>
    %242 = arith.mulf %214, %42 : vector<8x128xf32>
    %243 = arith.subf %241, %242 : vector<8x128xf32>
    %244 = arith.index_cast %arg0 : i32 to index
    %c7 = arith.constant 7 : index
    %245 = memref.load %arg2[%244, %c7] : memref<2x9xf32, #tpu.memory_space<smem>>
    %246 = arith.index_cast %arg0 : i32 to index
    %c7_112 = arith.constant 7 : index
    %247 = memref.load %arg3[%246, %c7_112] : memref<2x9xf32, #tpu.memory_space<smem>>
    %248 = vector.broadcast %245 : f32 to vector<8x128xf32>
    %249 = arith.mulf %240, %248 : vector<8x128xf32>
    %250 = vector.broadcast %247 : f32 to vector<8x128xf32>
    %251 = arith.mulf %243, %250 : vector<8x128xf32>
    %252 = arith.addf %249, %251 : vector<8x128xf32>
    %c0_113 = arith.constant 0 : index
    %c7_114 = arith.constant 7 : index
    %c0_115 = arith.constant 0 : index
    %c0_116 = arith.constant 0 : index
    %253 = vector.load %arg6[%c0_113, %c7_114, %c0_115, %c0_116] : memref<1x9x8x128xf32, #tpu.memory_space<vmem>>, vector<1x1x8x128xf32>
    %254 = vector.shape_cast %253 : vector<1x1x8x128xf32> to vector<8x128xf32>
    %255 = arith.mulf %61, %254 : vector<8x128xf32>
    %256 = arith.mulf %252, %54 : vector<8x128xf32>
    %257 = arith.addf %256, %255 : vector<8x128xf32>
    %c0_117 = arith.constant 0 : index
    %c7_118 = arith.constant 7 : index
    %c0_119 = arith.constant 0 : index
    %c0_120 = arith.constant 0 : index
    %258 = vector.load %arg7[%c0_117, %c7_118, %c0_119, %c0_120] : memref<1x9x8x128xf32, #tpu.memory_space<vmem>>, vector<1x1x8x128xf32>
    %259 = vector.shape_cast %258 : vector<1x1x8x128xf32> to vector<8x128xf32>
    %260 = vector.shape_cast %257 : vector<8x128xf32> to vector<1x1x8x128xf32>
    tpu.vector_store %arg7[%c0_117, %c7_118, %c0_119, %c0_120], %260 {strides = array<i32>} : memref<1x9x8x128xf32, #tpu.memory_space<vmem>>, vector<1x1x8x128xf32>,
    %c0_121 = arith.constant 0 : index
    %c7_122 = arith.constant 7 : index
    %c0_123 = arith.constant 0 : index
    %c0_124 = arith.constant 0 : index
    %261 = vector.load %arg9[%c0_121, %c7_122, %c0_123, %c0_124] : memref<1x9x8x128xf32, #tpu.memory_space<vmem>>, vector<1x1x8x128xf32>
    %262 = vector.shape_cast %261 : vector<1x1x8x128xf32> to vector<8x128xf32>
    %263 = vector.shape_cast %255 : vector<8x128xf32> to vector<1x1x8x128xf32>
    tpu.vector_store %arg9[%c0_121, %c7_122, %c0_123, %c0_124], %263 {strides = array<i32>} : memref<1x9x8x128xf32, #tpu.memory_space<vmem>>, vector<1x1x8x128xf32>,
    %264 = arith.mulf %240, %45 : vector<8x128xf32>
    %265 = arith.mulf %243, %42 : vector<8x128xf32>
    %266 = arith.addf %264, %265 : vector<8x128xf32>
    %267 = arith.mulf %243, %45 : vector<8x128xf32>
    %268 = arith.mulf %240, %42 : vector<8x128xf32>
    %269 = arith.subf %267, %268 : vector<8x128xf32>
    %270 = arith.index_cast %arg0 : i32 to index
    %c8 = arith.constant 8 : index
    %271 = memref.load %arg2[%270, %c8] : memref<2x9xf32, #tpu.memory_space<smem>>
    %272 = arith.index_cast %arg0 : i32 to index
    %c8_125 = arith.constant 8 : index
    %273 = memref.load %arg3[%272, %c8_125] : memref<2x9xf32, #tpu.memory_space<smem>>
    %274 = vector.broadcast %271 : f32 to vector<8x128xf32>
    %275 = arith.mulf %266, %274 : vector<8x128xf32>
    %276 = vector.broadcast %273 : f32 to vector<8x128xf32>
    %277 = arith.mulf %269, %276 : vector<8x128xf32>
    %278 = arith.addf %275, %277 : vector<8x128xf32>
    %c0_126 = arith.constant 0 : index
    %c8_127 = arith.constant 8 : index
    %c0_128 = arith.constant 0 : index
    %c0_129 = arith.constant 0 : index
    %279 = vector.load %arg6[%c0_126, %c8_127, %c0_128, %c0_129] : memref<1x9x8x128xf32, #tpu.memory_space<vmem>>, vector<1x1x8x128xf32>
    %280 = vector.shape_cast %279 : vector<1x1x8x128xf32> to vector<8x128xf32>
    %281 = arith.mulf %61, %280 : vector<8x128xf32>
    %282 = arith.mulf %278, %54 : vector<8x128xf32>
    %283 = arith.addf %282, %281 : vector<8x128xf32>
    %c0_130 = arith.constant 0 : index
    %c8_131 = arith.constant 8 : index
    %c0_132 = arith.constant 0 : index
    %c0_133 = arith.constant 0 : index
    %284 = vector.load %arg7[%c0_130, %c8_131, %c0_132, %c0_133] : memref<1x9x8x128xf32, #tpu.memory_space<vmem>>, vector<1x1x8x128xf32>
    %285 = vector.shape_cast %284 : vector<1x1x8x128xf32> to vector<8x128xf32>
    %286 = vector.shape_cast %283 : vector<8x128xf32> to vector<1x1x8x128xf32>
    tpu.vector_store %arg7[%c0_130, %c8_131, %c0_132, %c0_133], %286 {strides = array<i32>} : memref<1x9x8x128xf32, #tpu.memory_space<vmem>>, vector<1x1x8x128xf32>,
    %c0_134 = arith.constant 0 : index
    %c8_135 = arith.constant 8 : index
    %c0_136 = arith.constant 0 : index
    %c0_137 = arith.constant 0 : index
    %287 = vector.load %arg9[%c0_134, %c8_135, %c0_136, %c0_137] : memref<1x9x8x128xf32, #tpu.memory_space<vmem>>, vector<1x1x8x128xf32>
    %288 = vector.shape_cast %287 : vector<1x1x8x128xf32> to vector<8x128xf32>
    %289 = vector.shape_cast %281 : vector<8x128xf32> to vector<1x1x8x128xf32>
    tpu.vector_store %arg9[%c0_134, %c8_135, %c0_136, %c0_137], %289 {strides = array<i32>} : memref<1x9x8x128xf32, #tpu.memory_space<vmem>>, vector<1x1x8x128xf32>,
    return
  }
  func.func @transform_0(%arg0: i32, %arg1: i32, %arg2: memref<2x9xf32, #tpu.memory_space<smem>>, %arg3: memref<2x9xf32, #tpu.memory_space<smem>>, %arg4: memref<2x1xf32, #tpu.memory_space<smem>>) -> (i32, i32, i32) {
    %c0_i32 = arith.constant 0 : i32
    %c0_i32_0 = arith.constant 0 : i32
    return %arg0, %arg1, %c0_i32 : i32, i32, i32
  }
  func.func @transform_1(%arg0: i32, %arg1: i32, %arg2: memref<2x9xf32, #tpu.memory_space<smem>>, %arg3: memref<2x9xf32, #tpu.memory_space<smem>>, %arg4: memref<2x1xf32, #tpu.memory_space<smem>>) -> (i32, i32, i32, i32) {
    %c0_i32 = arith.constant 0 : i32
    %c0_i32_0 = arith.constant 0 : i32
    %c0_i32_1 = arith.constant 0 : i32
    return %arg0, %c0_i32, %arg1, %c0_i32_0 : i32, i32, i32, i32
  }
  func.func @transform_2(%arg0: i32, %arg1: i32, %arg2: memref<2x9xf32, #tpu.memory_space<smem>>, %arg3: memref<2x9xf32, #tpu.memory_space<smem>>, %arg4: memref<2x1xf32, #tpu.memory_space<smem>>) -> (i32, i32, i32, i32) {
    %c0_i32 = arith.constant 0 : i32
    %c0_i32_0 = arith.constant 0 : i32
    %c0_i32_1 = arith.constant 0 : i32
    return %arg0, %c0_i32, %arg1, %c0_i32_0 : i32, i32, i32, i32
  }
  func.func @transform_3(%arg0: i32, %arg1: i32, %arg2: memref<2x9xf32, #tpu.memory_space<smem>>, %arg3: memref<2x9xf32, #tpu.memory_space<smem>>, %arg4: memref<2x1xf32, #tpu.memory_space<smem>>) -> (i32, i32, i32, i32) {
    %c0_i32 = arith.constant 0 : i32
    %c0_i32_0 = arith.constant 0 : i32
    %c0_i32_1 = arith.constant 0 : i32
    return %arg0, %c0_i32, %arg1, %c0_i32_0 : i32, i32, i32, i32
  }
  func.func @transform_4(%arg0: i32, %arg1: i32, %arg2: memref<2x9xf32, #tpu.memory_space<smem>>, %arg3: memref<2x9xf32, #tpu.memory_space<smem>>, %arg4: memref<2x1xf32, #tpu.memory_space<smem>>) -> (i32, i32, i32, i32) {
    %c0_i32 = arith.constant 0 : i32
    %c0_i32_0 = arith.constant 0 : i32
    %c0_i32_1 = arith.constant 0 : i32
    return %arg0, %c0_i32, %arg1, %c0_i32_0 : i32, i32, i32, i32
  }
}

</mosaic_0001>

<llo_original>
// kernel: sine_gen.3
$region0: #{sine_gen.3}
  #allocation0 [shape = 'u32[]', space=smem, size = 0x4, offset = 0x4, fixed_abs, tag = 'smem constant byte address 0x4 - core index']
  #allocation1 [shape = 'u32[144,128]{1,0:T(1,128)}', space=vmem, size = 0x12000, scoped, tag = 'internal scratch']
  #allocation2 [shape = 's32[1]{0}', space=sflag, size = 0x4, scoped, tag = 'scoped memory for sine_gen.3']
  #allocation3 [shape = 'u8[1024]{0}', space=smem, size = 0x400, scoped, tag = 'prefetched SMEM operand 0']
  #allocation4 [shape = 'u8[1024]{0}', space=smem, size = 0x400, scoped, tag = 'prefetched SMEM operand 1']
  #allocation5 [shape = 'u8[1024]{0}', space=smem, size = 0x400, scoped, tag = 'prefetched SMEM operand 2']
  %s0 = inlined_call_operand.vmem [shape: f32[2,9], index: 0, kind: input, shape index: {}]
  %s1 = inlined_call_operand.vmem [shape: f32[2,9], index: 1, kind: input, shape index: {}]
  %s2 = inlined_call_operand.vmem [shape: f32[2,1], index: 2, kind: input, shape index: {}]
  %s3 = inlined_call_operand.vmem [shape: f32[2,8,128], index: 3, kind: input, shape index: {}]
  %s4 = inlined_call_operand.vmem [shape: f32[2,9,8,128], index: 4, kind: input, shape index: {}]
  %s5 = inlined_call_operand.vmem [shape: f32[2,9,8,128], index: 5, kind: output, shape index: {0}]
  %s6 = inlined_call_operand.hbm [shape: f32[2,1,8,128], index: 6, kind: output, shape index: {1}]
  %s7 = inlined_call_operand.vmem [shape: f32[2,9,8,128], index: 7, kind: output, shape index: {2}]
  %8 = xla_tuple %s5, %s6, %s7
  %s9 = sld [smem:[#allocation0]]
  $region57: #{sine_gen.3} parent=0
    _
  %s11 = ssub.s32 1, %s9
  %s12 = scalar_select 0, %s11, %s9
  %s13 = sshll.u32 %s0, 4
  %s14 = int_to_ptr.vmem [resolvable:$true] %s13
  %16 = dma.vmem_to_smem %s14, 32, [#allocation3], [#allocation2]
  %s17 = sshll.u32 %s1, 4
  %s18 = int_to_ptr.vmem [resolvable:$true] %s17
  %20 = dma.vmem_to_smem %s18, 32, [#allocation4], [#allocation2]
  %s21 = sshll.u32 %s2, 4
  %s22 = int_to_ptr.vmem [resolvable:$true] %s21
  %24 = dma.vmem_to_smem %s22, 32, [#allocation5], [#allocation2]
  %25 = dma.done [#allocation2], 96
  %26 = sfence
  $region1: #{sine_gen.3} parent=0
    #allocation6 [shape = 'u8[8192]{0}', space=vmem, size = 0x2000, scoped, tag = 'output window, operand 1']
    #allocation7 [shape = 's32[2]{0}', space=sflag, size = 0x8, scoped, tag = 'scoped memory for sine_gen.3']
    %27 = vsyncpa [#allocation7], 0
    %s28 = scalar_lea.sflag [#allocation7], 1
    %29 = vsyncpa %s28, 0
    loop: start=0, step=1, limit=4
    $region2: #{sine_gen.3} parent=1 // loop_pre_header
      _
    $region3: #{sine_gen.3} parent=1 // loop_header
      %s31 = sphi 0, %s35
      %p32 = scmp.ge.s32.totalorder %s31, 4
      %s38 = sphi 0, %s50
      %s39 = sphi 0, %s46
      %s40 = sphi 0, %s38
      %s41 = sphi 0, %s39
      %s42 = sphi 0, %s40
      %s43 = sphi 0, %s41
      %s55 = sphi 0, %s57
      %s58 = sphi 0, %s55
      %s59 = sphi 0, %s58
      %s75 = sphi 0, %s59
      %s83 = sphi 0, %s85
      %s86 = sphi 0, %s83
      %s87 = sphi 0, %s86
      %s103 = sphi 0, %s87
      %s111 = sphi 0, %s113
      %s114 = sphi 0, %s111
      %s115 = sphi 0, %s114
      %s131 = sphi 0, %s115
      %s139 = sphi 0, %s141
      %s142 = sphi 0, %s139
      %s143 = sphi 0, %s142
      %s159 = sphi 0, %s143
      %s167 = sphi 0, %s169
      %s170 = sphi 0, %s167
      %s171 = sphi 0, %s170
      %s187 = sphi 0, %s171
    $region4: #{sine_gen.3} parent=1 // loop_header_branch
      %34 = sbr.rel (%p32) target = $region8
    $region5: #{sine_gen.3} parent=1 // loop_body
      %s36 = ssub.s32 %s31, 1
      %s37 = ssub.s32 %s31, 2
      %s44 = sadd.s32 1, %s39
      %p45 = scmp.ge.s32.totalorder %s44, 1
      %s46 = scalar_select %p45, 0, %s44
      %s47 = sadd.s32 1, %s38
      %s48 = scalar_select %p45, %s47, %s38
      %p49 = scmp.ge.s32.totalorder %s48, 2
      %s50 = scalar_select %p49, 0, %s48
      %s51 = ssub.s32 %s38, %s50
      %s52 = ssub.s32 %s39, %s46
      %s53 = sor.u32 %s51, %s52
      %p54 = scmp.eq.s32.totalorder %s53, 0
      %s56 = sadd.s32 %s55, 1
      %s57 = scalar_select %p54, %s55, %s56
      %p60 = pneg %p54
      %p61 = scmp.eq.s32.totalorder %s31, 1
      %p62 = por %p60, %p61
      %p63 = scmp.ne.s32.totalorder %s55, %s58
      %p64 = scmp.eq.s32.totalorder %s31, 0
      %p65 = por %p63, %p64
      %p66 = scmp.ne.s32.totalorder %s55, %s58
      %p67 = scmp.eq.s32.totalorder %s36, 1
      %p68 = por %p66, %p67
      %p69 = scmp.ne.s32.totalorder %s58, %s59
      %p70 = scmp.eq.s32.totalorder %s36, 0
      %p71 = por %p69, %p70
      %p72 = scmp.ne.s32.totalorder %s58, %s59
      %p73 = scmp.eq.s32.totalorder %s37, 1
      %p74 = por %p72, %p73
      %p76 = scmp.ne.s32.totalorder %s59, %s75
      %p77 = scmp.eq.s32.totalorder %s37, 0
      %p78 = por %p76, %p77
      %s79 = ssub.s32 %s38, %s50
      %s80 = ssub.s32 %s39, %s46
      %s81 = sor.u32 %s79, %s80
      %p82 = scmp.eq.s32.totalorder %s81, 0
      %s84 = sadd.s32 %s83, 1
      %s85 = scalar_select %p82, %s83, %s84
      %p88 = pneg %p82
      %p89 = scmp.eq.s32.totalorder %s31, 1
      %p90 = por %p88, %p89
      %p91 = scmp.ne.s32.totalorder %s83, %s86
      %p92 = scmp.eq.s32.totalorder %s31, 0
      %p93 = por %p91, %p92
      %p94 = scmp.ne.s32.totalorder %s83, %s86
      %p95 = scmp.eq.s32.totalorder %s36, 1
      %p96 = por %p94, %p95
      %p97 = scmp.ne.s32.totalorder %s86, %s87
      %p98 = scmp.eq.s32.totalorder %s36, 0
      %p99 = por %p97, %p98
      %p100 = scmp.ne.s32.totalorder %s86, %s87
      %p101 = scmp.eq.s32.totalorder %s37, 1
      %p102 = por %p100, %p101
      %p104 = scmp.ne.s32.totalorder %s87, %s103
      %p105 = scmp.eq.s32.totalorder %s37, 0
      %p106 = por %p104, %p105
      %s107 = ssub.s32 %s38, %s50
      %s108 = ssub.s32 %s39, %s46
      %s109 = sor.u32 %s107, %s108
      %p110 = scmp.eq.s32.totalorder %s109, 0
      %s112 = sadd.s32 %s111, 1
      %s113 = scalar_select %p110, %s111, %s112
      %p116 = pneg %p110
      %p117 = scmp.eq.s32.totalorder %s31, 1
      %p118 = por %p116, %p117
      %p119 = scmp.ne.s32.totalorder %s111, %s114
      %p120 = scmp.eq.s32.totalorder %s31, 0
      %p121 = por %p119, %p120
      %p122 = scmp.ne.s32.totalorder %s111, %s114
      %p123 = scmp.eq.s32.totalorder %s36, 1
      %p124 = por %p122, %p123
      %p125 = scmp.ne.s32.totalorder %s114, %s115
      %p126 = scmp.eq.s32.totalorder %s36, 0
      %p127 = por %p125, %p126
      %p128 = scmp.ne.s32.totalorder %s114, %s115
      %p129 = scmp.eq.s32.totalorder %s37, 1
      %p130 = por %p128, %p129
      %p132 = scmp.ne.s32.totalorder %s115, %s131
      %p133 = scmp.eq.s32.totalorder %s37, 0
      %p134 = por %p132, %p133
      %s135 = ssub.s32 %s38, %s50
      %s136 = ssub.s32 %s39, %s46
      %s137 = sor.u32 %s135, %s136
      %p138 = scmp.eq.s32.totalorder %s137, 0
      %s140 = sadd.s32 %s139, 1
      %s141 = scalar_select %p138, %s139, %s140
      %p144 = pneg %p138
      %p145 = scmp.eq.s32.totalorder %s31, 1
      %p146 = por %p144, %p145
      %p147 = scmp.ne.s32.totalorder %s139, %s142
      %p148 = scmp.eq.s32.totalorder %s31, 0
      %p149 = por %p147, %p148
      %p150 = scmp.ne.s32.totalorder %s139, %s142
      %p151 = scmp.eq.s32.totalorder %s36, 1
      %p152 = por %p150, %p151
      %p153 = scmp.ne.s32.totalorder %s142, %s143
      %p154 = scmp.eq.s32.totalorder %s36, 0
      %p155 = por %p153, %p154
      %p156 = scmp.ne.s32.totalorder %s142, %s143
      %p157 = scmp.eq.s32.totalorder %s37, 1
      %p158 = por %p156, %p157
      %p160 = scmp.ne.s32.totalorder %s143, %s159
      %p161 = scmp.eq.s32.totalorder %s37, 0
      %p162 = por %p160, %p161
      %s163 = ssub.s32 %s38, %s50
      %s164 = ssub.s32 %s39, %s46
      %s165 = sor.u32 %s163, %s164
      %p166 = scmp.eq.s32.totalorder %s165, 0
      %s168 = sadd.s32 %s167, 1
      %s169 = scalar_select %p166, %s167, %s168
      %p172 = pneg %p166
      %p173 = scmp.eq.s32.totalorder %s31, 1
      %p174 = por %p172, %p173
      %p175 = scmp.ne.s32.totalorder %s167, %s170
      %p176 = scmp.eq.s32.totalorder %s31, 0
      %p177 = por %p175, %p176
      %p178 = scmp.ne.s32.totalorder %s167, %s170
      %p179 = scmp.eq.s32.totalorder %s36, 1
      %p180 = por %p178, %p179
      %p181 = scmp.ne.s32.totalorder %s170, %s171
      %p182 = scmp.eq.s32.totalorder %s36, 0
      %p183 = por %p181, %p182
      %p184 = scmp.ne.s32.totalorder %s170, %s171
      %p185 = scmp.eq.s32.totalorder %s37, 1
      %p186 = por %p184, %p185
      %p188 = scmp.ne.s32.totalorder %s171, %s187
      %p189 = scmp.eq.s32.totalorder %s37, 0
      %p190 = por %p188, %p189
      %p191 = scmp.le.s32.totalorder 1, %s31
      %p192 = scmp.lt.s32.totalorder %s31, 3
      %p193 = pnand %p191, %p192
      %p194 = pneg %p193
      // Predicated region
      $region9: #{sine_gen.3} parent=5 // pred_check
        _
      $region10: #{sine_gen.3} parent=5 // pred_check_branch
        %196 = sbr.rel (%p193) target = $region12
      $region11: #{sine_gen.3} parent=5 // pred_region
        %s197 = ssub.s32 %s31, 1
      $region12: #{sine_gen.3} parent=5 // pred_fallthru
        _
      %p198 = scmp.lt.s32.totalorder %s31, 2
      // Predicated region
      $region13: #{sine_gen.3} parent=5 // pred_check
        %p199 = pneg %p198
      $region14: #{sine_gen.3} parent=5 // pred_check_branch
        %201 = sbr.rel (%p199) target = $region16
      $region15: #{sine_gen.3} parent=5 // pred_region
        // Predicated region
        $region17: #{sine_gen.3} parent=15 // pred_check
          %p202 = pneg %p65
        $region18: #{sine_gen.3} parent=15 // pred_check_branch
          %204 = sbr.rel (%p202) target = $region20
        $region19: #{sine_gen.3} parent=15 // pred_region
          %p205 = scmp.lt.s32.totalorder %s38, 1
          %s206 = scalar_select %p205, %s38, 1
          %p207 = scmp.lt.s32.totalorder %s39, 0
          %s208 = scalar_select %p207, %s39, 0
          %s209 = sadd.s32 %s208, %s206
          %s210 = smul.addr %s209, 8
          %s211 = scalar_lea.vmem %s3, %s210
        $region20: #{sine_gen.3} parent=15 // pred_fallthru
          _
        // Predicated region
        $region21: #{sine_gen.3} parent=15 // pred_check
          %p212 = pneg %p93
        $region22: #{sine_gen.3} parent=15 // pred_check_branch
          %214 = sbr.rel (%p212) target = $region24
        $region23: #{sine_gen.3} parent=15 // pred_region
          %p215 = scmp.lt.s32.totalorder %s38, 1
          %s216 = scalar_select %p215, %s38, 1
          %p217 = scmp.lt.s32.totalorder %s39, 0
          %s218 = scalar_select %p217, %s39, 0
          %s219 = smul.addr %s216, 9
          %s220 = sadd.s32 %s218, %s219
          %s221 = smul.addr %s220, 8
          %s222 = scalar_lea.vmem %s4, %s221
        $region24: #{sine_gen.3} parent=15 // pred_fallthru
          _
      $region16: #{sine_gen.3} parent=5 // pred_fallthru
        _
      %p223 = scmp.le.s32.totalorder 1, %s31
      %p224 = scmp.lt.s32.totalorder %s31, 3
      %p225 = pnand %p223, %p224
      %p226 = pneg %p225
      // Predicated region
      $region25: #{sine_gen.3} parent=5 // pred_check
        _
      $region26: #{sine_gen.3} parent=5 // pred_check_branch
        %228 = sbr.rel (%p225) target = $region28
      $region27: #{sine_gen.3} parent=5 // pred_region
        %s229 = ssub.s32 %s31, 1
        %p230 = scmp.lt.s32.totalorder %s40, 1
        %s231 = scalar_select %p230, %s40, 1
        %p232 = scmp.lt.s32.totalorder %s41, 0
        %s233 = scalar_select %p232, %s41, 0
        %s234 = sadd.s32 %s233, %s231
        %s235 = smul.addr %s234, 8
        %s236 = scalar_lea.vmem %s3, %s235
        %p237 = pneg %p71
        %p238 = pneg %p68
        %p239 = scmp.lt.s32.totalorder %s40, 1
        %s240 = scalar_select %p239, %s40, 1
        %p241 = scmp.lt.s32.totalorder %s41, 0
        %s242 = scalar_select %p241, %s41, 0
        %s243 = smul.addr %s240, 9
        %s244 = sadd.s32 %s242, %s243
        %s245 = smul.addr %s244, 8
        %s246 = scalar_lea.vmem %s4, %s245
        %p247 = pneg %p99
        %p248 = pneg %p96
        %p249 = pneg %p127
        %p250 = pneg %p124
        %p251 = scmp.lt.s32.totalorder %s40, 1
        %s252 = scalar_select %p251, %s40, 1
        %p253 = scmp.lt.s32.totalorder %s41, 0
        %s254 = scalar_select %p253, %s41, 0
        %s255 = smul.addr %s252, 9
        %s256 = sadd.s32 %s254, %s255
        %s257 = smul.addr %s256, 8
        %s258 = scalar_lea.vmem %s5, %s257
        %p259 = pneg %p155
        %p260 = pneg %p152
        %s261 = sand.u32 %s142, 1
        %s262 = scalar_lea.sflag [#allocation7], %s261
        %s263 = sand.u32 %s142, 1
        %s264 = smul.addr %s263, 8
        %s265 = scalar_lea.vmem [#allocation6], %s264
        %p266 = pneg %p183
        %p267 = pneg %p180
        %p268 = scmp.lt.s32.totalorder %s40, 1
        %s269 = scalar_select %p268, %s40, 1
        %p270 = scmp.lt.s32.totalorder %s41, 0
        %s271 = scalar_select %p270, %s41, 0
        %s272 = smul.addr %s269, 9
        %s273 = sadd.s32 %s271, %s272
        %s274 = smul.addr %s273, 8
        %s275 = scalar_lea.vmem %s7, %s274
        %p276 = scmp.lt.s32.totalorder %s40, 1
        %s277 = scalar_select %p276, %s40, 1
        %p278 = scmp.lt.s32.totalorder %s41, 0
        %s279 = scalar_select %p278, %s41, 0
        %s280 = sadd.s32 %s279, %s277
        %s281 = smul.addr %s280, 8
        %s282 = scalar_lea.vmem %s3, %s281
        %p283 = scmp.lt.s32.totalorder %s40, 1
        %s284 = scalar_select %p283, %s40, 1
        %p285 = scmp.lt.s32.totalorder %s41, 0
        %s286 = scalar_select %p285, %s41, 0
        %s287 = smul.addr %s284, 9
        %s288 = sadd.s32 %s286, %s287
        %s289 = smul.addr %s288, 8
        %s290 = scalar_lea.vmem %s4, %s289
        %p291 = scmp.lt.s32.totalorder %s40, 1
        %s292 = scalar_select %p291, %s40, 1
        %p293 = scmp.lt.s32.totalorder %s41, 0
        %s294 = scalar_select %p293, %s41, 0
        %s295 = smul.addr %s292, 9
        %s296 = sadd.s32 %s294, %s295
        %s297 = smul.addr %s296, 8
        %s298 = scalar_lea.vmem %s5, %s297
        %p299 = scmp.lt.s32.totalorder %s40, 1
        %s300 = scalar_select %p299, %s40, 1
        %p301 = scmp.lt.s32.totalorder %s41, 0
        %s302 = scalar_select %p301, %s41, 0
        %s303 = smul.addr %s300, 9
        %s304 = sadd.s32 %s302, %s303
        %s305 = smul.addr %s304, 8
        %s306 = scalar_lea.vmem %s7, %s305
        %v307 = vld [vmem:[%s282] sm:$0xff]
        %v308 = vmul.f32 %v307, 4.1666666e-05
        %v309 = vlaneseq
        %v310 = vshrl.u32 %v309, 7
        %v311 = vadd.s32 %v310, 8
        %v312 = vadd.s32 %v310, 16
        %v313 = vadd.s32 %v310, 24
        %v314 = vadd.s32 %v310, 32
        %v315 = vadd.s32 %v310, 40
        %v316 = vadd.s32 %v310, 48
        %v317 = vadd.s32 %v310, 56
        %v318 = vadd.s32 %v310, 64
        %v319 = vadd.s32 %v310, 72
        %v320 = vadd.s32 %v310, 80
        %v321 = vadd.s32 %v310, 88
        %v322 = vadd.s32 %v310, 96
        %v323 = vadd.s32 %v310, 104
        %v324 = vadd.s32 %v310, 112
        %v325 = vadd.s32 %v310, 120
        %v326 = vlaneseq
        %v327 = vand.u32 %v326, 127
        %vm328 = vcmp.le.s32.totalorder %v310, %v327
        %vm329 = vcmp.le.s32.totalorder %v311, %v327
        %vm330 = vcmp.le.s32.totalorder %v312, %v327
        %vm331 = vcmp.le.s32.totalorder %v313, %v327
        %vm332 = vcmp.le.s32.totalorder %v314, %v327
        %vm333 = vcmp.le.s32.totalorder %v315, %v327
        %vm334 = vcmp.le.s32.totalorder %v316, %v327
        %vm335 = vcmp.le.s32.totalorder %v317, %v327
        %vm336 = vcmp.le.s32.totalorder %v318, %v327
        %vm337 = vcmp.le.s32.totalorder %v319, %v327
        %vm338 = vcmp.le.s32.totalorder %v320, %v327
        %vm339 = vcmp.le.s32.totalorder %v321, %v327
        %vm340 = vcmp.le.s32.totalorder %v322, %v327
        %vm341 = vcmp.le.s32.totalorder %v323, %v327
        %vm342 = vcmp.le.s32.totalorder %v324, %v327
        %vm343 = vcmp.le.s32.totalorder %v325, %v327
        %v344 = vsel %vm328, 1, 0
        %v345 = vsel %vm329, 1, 0
        %v346 = vsel %vm330, 1, 0
        %v347 = vsel %vm331, 1, 0
        %v348 = vsel %vm332, 1, 0
        %v349 = vsel %vm333, 1, 0
        %v350 = vsel %vm334, 1, 0
        %v351 = vsel %vm335, 1, 0
        %v352 = vsel %vm336, 1, 0
        %v353 = vsel %vm337, 1, 0
        %v354 = vsel %vm338, 1, 0
        %v355 = vsel %vm339, 1, 0
        %v356 = vsel %vm340, 1, 0
        %v357 = vsel %vm341, 1, 0
        %v358 = vsel %vm342, 1, 0
        %v359 = vsel %vm343, 1, 0
        %v360 = vcvt.s32.f32 %v344
        %v361 = vcvt.s32.f32 %v345
        %v362 = vcvt.s32.f32 %v346
        %v363 = vcvt.s32.f32 %v347
        %v364 = vcvt.s32.f32 %v348
        %v365 = vcvt.s32.f32 %v349
        %v366 = vcvt.s32.f32 %v350
        %v367 = vcvt.s32.f32 %v351
        %v368 = vcvt.s32.f32 %v352
        %v369 = vcvt.s32.f32 %v353
        %v370 = vcvt.s32.f32 %v354
        %v371 = vcvt.s32.f32 %v355
        %v372 = vcvt.s32.f32 %v356
        %v373 = vcvt.s32.f32 %v357
        %v374 = vcvt.s32.f32 %v358
        %v375 = vcvt.s32.f32 %v359
        %376 = vmatprep.subr.mxu0 0.0
        %v377 = vand.u32 %v360, 4294901760
        %378 = vmatpush1.msra.mxu0 %v377
        %379 = vmatprep.subr.mxu0 0.0
        %v380 = vand.u32 %v361, 4294901760
        %381 = vmatpush1.msra.mxu0 %v380
        %382 = vmatprep.subr.mxu0 0.0
        %v383 = vand.u32 %v362, 4294901760
        %384 = vmatpush1.msra.mxu0 %v383
        %385 = vmatprep.subr.mxu0 0.0
        %v386 = vand.u32 %v363, 4294901760
        %387 = vmatpush1.msra.mxu0 %v386
        %388 = vmatprep.subr.mxu0 0.0
        %v389 = vand.u32 %v364, 4294901760
        %390 = vmatpush1.msra.mxu0 %v389
        %391 = vmatprep.subr.mxu0 0.0
        %v392 = vand.u32 %v365, 4294901760
        %393 = vmatpush1.msra.mxu0 %v392
        %394 = vmatprep.subr.mxu0 0.0
        %v395 = vand.u32 %v366, 4294901760
        %396 = vmatpush1.msra.mxu0 %v395
        %397 = vmatprep.subr.mxu0 0.0
        %v398 = vand.u32 %v367, 4294901760
        %399 = vmatpush1.msra.mxu0 %v398
        %400 = vmatprep.subr.mxu0 0.0
        %v401 = vand.u32 %v368, 4294901760
        %402 = vmatpush1.msra.mxu0 %v401
        %403 = vmatprep.subr.mxu0 0.0
        %v404 = vand.u32 %v369, 4294901760
        %405 = vmatpush1.msra.mxu0 %v404
        %406 = vmatprep.subr.mxu0 0.0
        %v407 = vand.u32 %v370, 4294901760
        %408 = vmatpush1.msra.mxu0 %v407
        %409 = vmatprep.subr.mxu0 0.0
        %v410 = vand.u32 %v371, 4294901760
        %411 = vmatpush1.msra.mxu0 %v410
        %412 = vmatprep.subr.mxu0 0.0
        %v413 = vand.u32 %v372, 4294901760
        %414 = vmatpush1.msra.mxu0 %v413
        %415 = vmatprep.subr.mxu0 0.0
        %v416 = vand.u32 %v373, 4294901760
        %417 = vmatpush1.msra.mxu0 %v416
        %418 = vmatprep.subr.mxu0 0.0
        %v419 = vand.u32 %v374, 4294901760
        %420 = vmatpush1.msra.mxu0 %v419
        %421 = vmatprep.subr.mxu0 0.0
        %v422 = vand.u32 %v375, 4294901760
        %423 = vmatpush1.msra.mxu0 %v422
        %424 = vmatprep.subr.mxu0 0.0
        %425 = vmatpush1.msra.mxu0 0.0
        %426 = vmatprep.subr.mxu0 0.0
        %427 = vmatpush1.msra.mxu0 0.0
        %428 = vmatprep.subr.mxu0 0.0
        %429 = vmatpush1.msra.mxu0 0.0
        %430 = vmatprep.subr.mxu0 0.0
        %431 = vmatpush1.msra.mxu0 0.0
        %432 = vmatprep.subr.mxu0 0.0
        %433 = vmatpush1.msra.mxu0 0.0
        %434 = vmatprep.subr.mxu0 0.0
        %435 = vmatpush1.msra.mxu0 0.0
        %436 = vmatprep.subr.mxu0 0.0
        %437 = vmatpush1.msra.mxu0 0.0
        %438 = vmatprep.subr.mxu0 0.0
        %439 = vmatpush1.msra.mxu0 0.0
        %440 = vmatprep.subr.mxu0 0.0
        %441 = vmatpush1.msra.mxu0 0.0
        %442 = vmatprep.subr.mxu0 0.0
        %443 = vmatpush1.msra.mxu0 0.0
        %444 = vmatprep.subr.mxu0 0.0
        %445 = vmatpush1.msra.mxu0 0.0
        %446 = vmatprep.subr.mxu0 0.0
        %447 = vmatpush1.msra.mxu0 0.0
        %448 = vmatprep.subr.mxu0 0.0
        %449 = vmatpush1.msra.mxu0 0.0
        %450 = vmatprep.subr.mxu0 0.0
        %451 = vmatpush1.msra.mxu0 0.0
        %452 = vmatprep.subr.mxu0 0.0
        %453 = vmatpush1.msra.mxu0 0.0
        %454 = vmatprep.subr.mxu0 0.0
        %455 = vmatpush1.msra.mxu0 0.0
        %456 = vmatprep.mubr.f32.mxu0 0.0
        %v457 = vand.u32 %v308, 4294901760
        %v458 = vsub.f32 %v308, %v457
        %v459 = vand.u32 %v458, 4294901760
        %v460 = vsub.f32 %v458, %v459
        %v461 = vand.u32 %v460, 4294901760
        %462 = vmatmul.mubr.f32.gmra.mrb[0].mxu0 %v461
        %v463 = vpop.f32.mrb[0].mxu0
        %v464 = vadd.f32 0.0, %v463
        %v465 = vpop.f32.mrb[0].mxu0
        %466 = vdwg.mxu0
        %467 = vmatprep.subr.mxu0 0.0
        %v468 = vand.u32 %v360, 4294901760
        %v469 = vsub.f32 %v360, %v468
        %v470 = vand.u32 %v469, 4294901760
        %v471 = vsub.f32 %v469, %v470
        %v472 = vand.u32 %v471, 4294901760
        %473 = vmatpush1.msra.mxu0 %v472
        %474 = vmatprep.subr.mxu0 0.0
        %v475 = vand.u32 %v361, 4294901760
        %v476 = vsub.f32 %v361, %v475
        %v477 = vand.u32 %v476, 4294901760
        %v478 = vsub.f32 %v476, %v477
        %v479 = vand.u32 %v478, 4294901760
        %480 = vmatpush1.msra.mxu0 %v479
        %481 = vmatprep.subr.mxu0 0.0
        %v482 = vand.u32 %v362, 4294901760
        %v483 = vsub.f32 %v362, %v482
        %v484 = vand.u32 %v483, 4294901760
        %v485 = vsub.f32 %v483, %v484
        %v486 = vand.u32 %v485, 4294901760
        %487 = vmatpush1.msra.mxu0 %v486
        %488 = vmatprep.subr.mxu0 0.0
        %v489 = vand.u32 %v363, 4294901760
        %v490 = vsub.f32 %v363, %v489
        %v491 = vand.u32 %v490, 4294901760
        %v492 = vsub.f32 %v490, %v491
        %v493 = vand.u32 %v492, 4294901760
        %494 = vmatpush1.msra.mxu0 %v493
        %495 = vmatprep.subr.mxu0 0.0
        %v496 = vand.u32 %v364, 4294901760
        %v497 = vsub.f32 %v364, %v496
        %v498 = vand.u32 %v497, 4294901760
        %v499 = vsub.f32 %v497, %v498
        %v500 = vand.u32 %v499, 4294901760
        %501 = vmatpush1.msra.mxu0 %v500
        %502 = vmatprep.subr.mxu0 0.0
        %v503 = vand.u32 %v365, 4294901760
        %v504 = vsub.f32 %v365, %v503
        %v505 = vand.u32 %v504, 4294901760
        %v506 = vsub.f32 %v504, %v505
        %v507 = vand.u32 %v506, 4294901760
        %508 = vmatpush1.msra.mxu0 %v507
        %509 = vmatprep.subr.mxu0 0.0
        %v510 = vand.u32 %v366, 4294901760
        %v511 = vsub.f32 %v366, %v510
        %v512 = vand.u32 %v511, 4294901760
        %v513 = vsub.f32 %v511, %v512
        %v514 = vand.u32 %v513, 4294901760
        %515 = vmatpush1.msra.mxu0 %v514
        %516 = vmatprep.subr.mxu0 0.0
        %v517 = vand.u32 %v367, 4294901760
        %v518 = vsub.f32 %v367, %v517
        %v519 = vand.u32 %v518, 4294901760
        %v520 = vsub.f32 %v518, %v519
        %v521 = vand.u32 %v520, 4294901760
        %522 = vmatpush1.msra.mxu0 %v521
        %523 = vmatprep.subr.mxu0 0.0
        %v524 = vand.u32 %v368, 4294901760
        %v525 = vsub.f32 %v368, %v524
        %v526 = vand.u32 %v525, 4294901760
        %v527 = vsub.f32 %v525, %v526
        %v528 = vand.u32 %v527, 4294901760
        %529 = vmatpush1.msra.mxu0 %v528
        %530 = vmatprep.subr.mxu0 0.0
        %v531 = vand.u32 %v369, 4294901760
        %v532 = vsub.f32 %v369, %v531
        %v533 = vand.u32 %v532, 4294901760
        %v534 = vsub.f32 %v532, %v533
        %v535 = vand.u32 %v534, 4294901760
        %536 = vmatpush1.msra.mxu0 %v535
        %537 = vmatprep.subr.mxu0 0.0
        %v538 = vand.u32 %v370, 4294901760
        %v539 = vsub.f32 %v370, %v538
        %v540 = vand.u32 %v539, 4294901760
        %v541 = vsub.f32 %v539, %v540
        %v542 = vand.u32 %v541, 4294901760
        %543 = vmatpush1.msra.mxu0 %v542
        %544 = vmatprep.subr.mxu0 0.0
        %v545 = vand.u32 %v371, 4294901760
        %v546 = vsub.f32 %v371, %v545
        %v547 = vand.u32 %v546, 4294901760
        %v548 = vsub.f32 %v546, %v547
        %v549 = vand.u32 %v548, 4294901760
        %550 = vmatpush1.msra.mxu0 %v549
        %551 = vmatprep.subr.mxu0 0.0
        %v552 = vand.u32 %v372, 4294901760
        %v553 = vsub.f32 %v372, %v552
        %v554 = vand.u32 %v553, 4294901760
        %v555 = vsub.f32 %v553, %v554
        %v556 = vand.u32 %v555, 4294901760
        %557 = vmatpush1.msra.mxu0 %v556
        %558 = vmatprep.subr.mxu0 0.0
        %v559 = vand.u32 %v373, 4294901760
        %v560 = vsub.f32 %v373, %v559
        %v561 = vand.u32 %v560, 4294901760
        %v562 = vsub.f32 %v560, %v561
        %v563 = vand.u32 %v562, 4294901760
        %564 = vmatpush1.msra.mxu0 %v563
        %565 = vmatprep.subr.mxu0 0.0
        %v566 = vand.u32 %v374, 4294901760
        %v567 = vsub.f32 %v374, %v566
        %v568 = vand.u32 %v567, 4294901760
        %v569 = vsub.f32 %v567, %v568
        %v570 = vand.u32 %v569, 4294901760
        %571 = vmatpush1.msra.mxu0 %v570
        %572 = vmatprep.subr.mxu0 0.0
        %v573 = vand.u32 %v375, 4294901760
        %v574 = vsub.f32 %v375, %v573
        %v575 = vand.u32 %v574, 4294901760
        %v576 = vsub.f32 %v574, %v575
        %v577 = vand.u32 %v576, 4294901760
        %578 = vmatpush1.msra.mxu0 %v577
        %579 = vmatprep.subr.mxu0 0.0
        %580 = vmatpush1.msra.mxu0 0.0
        %581 = vmatprep.subr.mxu0 0.0
        %582 = vmatpush1.msra.mxu0 0.0
        %583 = vmatprep.subr.mxu0 0.0
        %584 = vmatpush1.msra.mxu0 0.0
        %585 = vmatprep.subr.mxu0 0.0
        %586 = vmatpush1.msra.mxu0 0.0
        %587 = vmatprep.subr.mxu0 0.0
        %588 = vmatpush1.msra.mxu0 0.0
        %589 = vmatprep.subr.mxu0 0.0
        %590 = vmatpush1.msra.mxu0 0.0
        %591 = vmatprep.subr.mxu0 0.0
        %592 = vmatpush1.msra.mxu0 0.0
        %593 = vmatprep.subr.mxu0 0.0
        %594 = vmatpush1.msra.mxu0 0.0
        %595 = vmatprep.subr.mxu0 0.0
        %596 = vmatpush1.msra.mxu0 0.0
        %597 = vmatprep.subr.mxu0 0.0
        %598 = vmatpush1.msra.mxu0 0.0
        %599 = vmatprep.subr.mxu0 0.0
        %600 = vmatpush1.msra.mxu0 0.0
        %601 = vmatprep.subr.mxu0 0.0
        %602 = vmatpush1.msra.mxu0 0.0
        %603 = vmatprep.subr.mxu0 0.0
        %604 = vmatpush1.msra.mxu0 0.0
        %605 = vmatprep.subr.mxu0 0.0
        %606 = vmatpush1.msra.mxu0 0.0
        %607 = vmatprep.subr.mxu0 0.0
        %608 = vmatpush1.msra.mxu0 0.0
        %609 = vmatprep.subr.mxu0 0.0
        %610 = vmatpush1.msra.mxu0 0.0
        %611 = vmatprep.mubr.f32.mxu0 0.0
        %v612 = vand.u32 %v308, 4294901760
        %613 = vmatmul.mubr.f32.gmra.mrb[0].mxu0 %v612
        %v614 = vpop.f32.mrb[0].mxu0
        %v615 = vadd.f32 %v464, %v614
        %v616 = vpop.f32.mrb[0].mxu0
        %617 = vdwg.mxu0
        %618 = vmatprep.subr.mxu0 0.0
        %v619 = vand.u32 %v360, 4294901760
        %v620 = vsub.f32 %v360, %v619
        %621 = vmatpush1.msra.mxu0 %v620
        %622 = vmatprep.subr.mxu0 0.0
        %v623 = vand.u32 %v361, 4294901760
        %v624 = vsub.f32 %v361, %v623
        %625 = vmatpush1.msra.mxu0 %v624
        %626 = vmatprep.subr.mxu0 0.0
        %v627 = vand.u32 %v362, 4294901760
        %v628 = vsub.f32 %v362, %v627
        %629 = vmatpush1.msra.mxu0 %v628
        %630 = vmatprep.subr.mxu0 0.0
        %v631 = vand.u32 %v363, 4294901760
        %v632 = vsub.f32 %v363, %v631
        %633 = vmatpush1.msra.mxu0 %v632
        %634 = vmatprep.subr.mxu0 0.0
        %v635 = vand.u32 %v364, 4294901760
        %v636 = vsub.f32 %v364, %v635
        %637 = vmatpush1.msra.mxu0 %v636
        %638 = vmatprep.subr.mxu0 0.0
        %v639 = vand.u32 %v365, 4294901760
        %v640 = vsub.f32 %v365, %v639
        %641 = vmatpush1.msra.mxu0 %v640
        %642 = vmatprep.subr.mxu0 0.0
        %v643 = vand.u32 %v366, 4294901760
        %v644 = vsub.f32 %v366, %v643
        %645 = vmatpush1.msra.mxu0 %v644
        %646 = vmatprep.subr.mxu0 0.0
        %v647 = vand.u32 %v367, 4294901760
        %v648 = vsub.f32 %v367, %v647
        %649 = vmatpush1.msra.mxu0 %v648
        %650 = vmatprep.subr.mxu0 0.0
        %v651 = vand.u32 %v368, 4294901760
        %v652 = vsub.f32 %v368, %v651
        %653 = vmatpush1.msra.mxu0 %v652
        %654 = vmatprep.subr.mxu0 0.0
        %v655 = vand.u32 %v369, 4294901760
        %v656 = vsub.f32 %v369, %v655
        %657 = vmatpush1.msra.mxu0 %v656
        %658 = vmatprep.subr.mxu0 0.0
        %v659 = vand.u32 %v370, 4294901760
        %v660 = vsub.f32 %v370, %v659
        %661 = vmatpush1.msra.mxu0 %v660
        %662 = vmatprep.subr.mxu0 0.0
        %v663 = vand.u32 %v371, 4294901760
        %v664 = vsub.f32 %v371, %v663
        %665 = vmatpush1.msra.mxu0 %v664
        %666 = vmatprep.subr.mxu0 0.0
        %v667 = vand.u32 %v372, 4294901760
        %v668 = vsub.f32 %v372, %v667
        %669 = vmatpush1.msra.mxu0 %v668
        %670 = vmatprep.subr.mxu0 0.0
        %v671 = vand.u32 %v373, 4294901760
        %v672 = vsub.f32 %v373, %v671
        %673 = vmatpush1.msra.mxu0 %v672
        %674 = vmatprep.subr.mxu0 0.0
        %v675 = vand.u32 %v374, 4294901760
        %v676 = vsub.f32 %v374, %v675
        %677 = vmatpush1.msra.mxu0 %v676
        %678 = vmatprep.subr.mxu0 0.0
        %v679 = vand.u32 %v375, 4294901760
        %v680 = vsub.f32 %v375, %v679
        %681 = vmatpush1.msra.mxu0 %v680
        %682 = vmatprep.subr.mxu0 0.0
        %683 = vmatpush1.msra.mxu0 0.0
        %684 = vmatprep.subr.mxu0 0.0
        %685 = vmatpush1.msra.mxu0 0.0
        %686 = vmatprep.subr.mxu0 0.0
        %687 = vmatpush1.msra.mxu0 0.0
        %688 = vmatprep.subr.mxu0 0.0
        %689 = vmatpush1.msra.mxu0 0.0
        %690 = vmatprep.subr.mxu0 0.0
        %691 = vmatpush1.msra.mxu0 0.0
        %692 = vmatprep.subr.mxu0 0.0
        %693 = vmatpush1.msra.mxu0 0.0
        %694 = vmatprep.subr.mxu0 0.0
        %695 = vmatpush1.msra.mxu0 0.0
        %696 = vmatprep.subr.mxu0 0.0
        %697 = vmatpush1.msra.mxu0 0.0
        %698 = vmatprep.subr.mxu0 0.0
        %699 = vmatpush1.msra.mxu0 0.0
        %700 = vmatprep.subr.mxu0 0.0
        %701 = vmatpush1.msra.mxu0 0.0
        %702 = vmatprep.subr.mxu0 0.0
        %703 = vmatpush1.msra.mxu0 0.0
        %704 = vmatprep.subr.mxu0 0.0
        %705 = vmatpush1.msra.mxu0 0.0
        %706 = vmatprep.subr.mxu0 0.0
        %707 = vmatpush1.msra.mxu0 0.0
        %708 = vmatprep.subr.mxu0 0.0
        %709 = vmatpush1.msra.mxu0 0.0
        %710 = vmatprep.subr.mxu0 0.0
        %711 = vmatpush1.msra.mxu0 0.0
        %712 = vmatprep.subr.mxu0 0.0
        %713 = vmatpush1.msra.mxu0 0.0
        %714 = vmatprep.mubr.f32.mxu0 0.0
        %v715 = vand.u32 %v308, 4294901760
        %v716 = vsub.f32 %v308, %v715
        %717 = vmatmul.mubr.f32.gmra.mrb[0].mxu0 %v716
        %v718 = vpop.f32.mrb[0].mxu0
        %v719 = vadd.f32 %v615, %v718
        %v720 = vpop.f32.mrb[0].mxu0
        %721 = vdwg.mxu0
        %722 = vmatprep.subr.mxu0 0.0
        %v723 = vand.u32 %v360, 4294901760
        %724 = vmatpush1.msra.mxu0 %v723
        %725 = vmatprep.subr.mxu0 0.0
        %v726 = vand.u32 %v361, 4294901760
        %727 = vmatpush1.msra.mxu0 %v726
        %728 = vmatprep.subr.mxu0 0.0
        %v729 = vand.u32 %v362, 4294901760
        %730 = vmatpush1.msra.mxu0 %v729
        %731 = vmatprep.subr.mxu0 0.0
        %v732 = vand.u32 %v363, 4294901760
        %733 = vmatpush1.msra.mxu0 %v732
        %734 = vmatprep.subr.mxu0 0.0
        %v735 = vand.u32 %v364, 4294901760
        %736 = vmatpush1.msra.mxu0 %v735
        %737 = vmatprep.subr.mxu0 0.0
        %v738 = vand.u32 %v365, 4294901760
        %739 = vmatpush1.msra.mxu0 %v738
        %740 = vmatprep.subr.mxu0 0.0
        %v741 = vand.u32 %v366, 4294901760
        %742 = vmatpush1.msra.mxu0 %v741
        %743 = vmatprep.subr.mxu0 0.0
        %v744 = vand.u32 %v367, 4294901760
        %745 = vmatpush1.msra.mxu0 %v744
        %746 = vmatprep.subr.mxu0 0.0
        %v747 = vand.u32 %v368, 4294901760
        %748 = vmatpush1.msra.mxu0 %v747
        %749 = vmatprep.subr.mxu0 0.0
        %v750 = vand.u32 %v369, 4294901760
        %751 = vmatpush1.msra.mxu0 %v750
        %752 = vmatprep.subr.mxu0 0.0
        %v753 = vand.u32 %v370, 4294901760
        %754 = vmatpush1.msra.mxu0 %v753
        %755 = vmatprep.subr.mxu0 0.0
        %v756 = vand.u32 %v371, 4294901760
        %757 = vmatpush1.msra.mxu0 %v756
        %758 = vmatprep.subr.mxu0 0.0
        %v759 = vand.u32 %v372, 4294901760
        %760 = vmatpush1.msra.mxu0 %v759
        %761 = vmatprep.subr.mxu0 0.0
        %v762 = vand.u32 %v373, 4294901760
        %763 = vmatpush1.msra.mxu0 %v762
        %764 = vmatprep.subr.mxu0 0.0
        %v765 = vand.u32 %v374, 4294901760
        %766 = vmatpush1.msra.mxu0 %v765
        %767 = vmatprep.subr.mxu0 0.0
        %v768 = vand.u32 %v375, 4294901760
        %769 = vmatpush1.msra.mxu0 %v768
        %770 = vmatprep.subr.mxu0 0.0
        %771 = vmatpush1.msra.mxu0 0.0
        %772 = vmatprep.subr.mxu0 0.0
        %773 = vmatpush1.msra.mxu0 0.0
        %774 = vmatprep.subr.mxu0 0.0
        %775 = vmatpush1.msra.mxu0 0.0
        %776 = vmatprep.subr.mxu0 0.0
        %777 = vmatpush1.msra.mxu0 0.0
        %778 = vmatprep.subr.mxu0 0.0
        %779 = vmatpush1.msra.mxu0 0.0
        %780 = vmatprep.subr.mxu0 0.0
        %781 = vmatpush1.msra.mxu0 0.0
        %782 = vmatprep.subr.mxu0 0.0
        %783 = vmatpush1.msra.mxu0 0.0
        %784 = vmatprep.subr.mxu0 0.0
        %785 = vmatpush1.msra.mxu0 0.0
        %786 = vmatprep.subr.mxu0 0.0
        %787 = vmatpush1.msra.mxu0 0.0
        %788 = vmatprep.subr.mxu0 0.0
        %789 = vmatpush1.msra.mxu0 0.0
        %790 = vmatprep.subr.mxu0 0.0
        %791 = vmatpush1.msra.mxu0 0.0
        %792 = vmatprep.subr.mxu0 0.0
        %793 = vmatpush1.msra.mxu0 0.0
        %794 = vmatprep.subr.mxu0 0.0
        %795 = vmatpush1.msra.mxu0 0.0
        %796 = vmatprep.subr.mxu0 0.0
        %797 = vmatpush1.msra.mxu0 0.0
        %798 = vmatprep.subr.mxu0 0.0
        %799 = vmatpush1.msra.mxu0 0.0
        %800 = vmatprep.subr.mxu0 0.0
        %801 = vmatpush1.msra.mxu0 0.0
        %802 = vmatprep.mubr.f32.mxu0 0.0
        %v803 = vand.u32 %v308, 4294901760
        %v804 = vsub.f32 %v308, %v803
        %v805 = vand.u32 %v804, 4294901760
        %806 = vmatmul.mubr.f32.gmra.mrb[0].mxu0 %v805
        %v807 = vpop.f32.mrb[0].mxu0
        %v808 = vadd.f32 %v719, %v807
        %v809 = vpop.f32.mrb[0].mxu0
        %810 = vdwg.mxu0
        %811 = vmatprep.subr.mxu0 0.0
        %v812 = vand.u32 %v360, 4294901760
        %v813 = vsub.f32 %v360, %v812
        %v814 = vand.u32 %v813, 4294901760
        %815 = vmatpush1.msra.mxu0 %v814
        %816 = vmatprep.subr.mxu0 0.0
        %v817 = vand.u32 %v361, 4294901760
        %v818 = vsub.f32 %v361, %v817
        %v819 = vand.u32 %v818, 4294901760
        %820 = vmatpush1.msra.mxu0 %v819
        %821 = vmatprep.subr.mxu0 0.0
        %v822 = vand.u32 %v362, 4294901760
        %v823 = vsub.f32 %v362, %v822
        %v824 = vand.u32 %v823, 4294901760
        %825 = vmatpush1.msra.mxu0 %v824
        %826 = vmatprep.subr.mxu0 0.0
        %v827 = vand.u32 %v363, 4294901760
        %v828 = vsub.f32 %v363, %v827
        %v829 = vand.u32 %v828, 4294901760
        %830 = vmatpush1.msra.mxu0 %v829
        %831 = vmatprep.subr.mxu0 0.0
        %v832 = vand.u32 %v364, 4294901760
        %v833 = vsub.f32 %v364, %v832
        %v834 = vand.u32 %v833, 4294901760
        %835 = vmatpush1.msra.mxu0 %v834
        %836 = vmatprep.subr.mxu0 0.0
        %v837 = vand.u32 %v365, 4294901760
        %v838 = vsub.f32 %v365, %v837
        %v839 = vand.u32 %v838, 4294901760
        %840 = vmatpush1.msra.mxu0 %v839
        %841 = vmatprep.subr.mxu0 0.0
        %v842 = vand.u32 %v366, 4294901760
        %v843 = vsub.f32 %v366, %v842
        %v844 = vand.u32 %v843, 4294901760
        %845 = vmatpush1.msra.mxu0 %v844
        %846 = vmatprep.subr.mxu0 0.0
        %v847 = vand.u32 %v367, 4294901760
        %v848 = vsub.f32 %v367, %v847
        %v849 = vand.u32 %v848, 4294901760
        %850 = vmatpush1.msra.mxu0 %v849
        %851 = vmatprep.subr.mxu0 0.0
        %v852 = vand.u32 %v368, 4294901760
        %v853 = vsub.f32 %v368, %v852
        %v854 = vand.u32 %v853, 4294901760
        %855 = vmatpush1.msra.mxu0 %v854
        %856 = vmatprep.subr.mxu0 0.0
        %v857 = vand.u32 %v369, 4294901760
        %v858 = vsub.f32 %v369, %v857
        %v859 = vand.u32 %v858, 4294901760
        %860 = vmatpush1.msra.mxu0 %v859
        %861 = vmatprep.subr.mxu0 0.0
        %v862 = vand.u32 %v370, 4294901760
        %v863 = vsub.f32 %v370, %v862
        %v864 = vand.u32 %v863, 4294901760
        %865 = vmatpush1.msra.mxu0 %v864
        %866 = vmatprep.subr.mxu0 0.0
        %v867 = vand.u32 %v371, 4294901760
        %v868 = vsub.f32 %v371, %v867
        %v869 = vand.u32 %v868, 4294901760
        %870 = vmatpush1.msra.mxu0 %v869
        %871 = vmatprep.subr.mxu0 0.0
        %v872 = vand.u32 %v372, 4294901760
        %v873 = vsub.f32 %v372, %v872
        %v874 = vand.u32 %v873, 4294901760
        %875 = vmatpush1.msra.mxu0 %v874
        %876 = vmatprep.subr.mxu0 0.0
        %v877 = vand.u32 %v373, 4294901760
        %v878 = vsub.f32 %v373, %v877
        %v879 = vand.u32 %v878, 4294901760
        %880 = vmatpush1.msra.mxu0 %v879
        %881 = vmatprep.subr.mxu0 0.0
        %v882 = vand.u32 %v374, 4294901760
        %v883 = vsub.f32 %v374, %v882
        %v884 = vand.u32 %v883, 4294901760
        %885 = vmatpush1.msra.mxu0 %v884
        %886 = vmatprep.subr.mxu0 0.0
        %v887 = vand.u32 %v375, 4294901760
        %v888 = vsub.f32 %v375, %v887
        %v889 = vand.u32 %v888, 4294901760
        %890 = vmatpush1.msra.mxu0 %v889
        %891 = vmatprep.subr.mxu0 0.0
        %892 = vmatpush1.msra.mxu0 0.0
        %893 = vmatprep.subr.mxu0 0.0
        %894 = vmatpush1.msra.mxu0 0.0
        %895 = vmatprep.subr.mxu0 0.0
        %896 = vmatpush1.msra.mxu0 0.0
        %897 = vmatprep.subr.mxu0 0.0
        %898 = vmatpush1.msra.mxu0 0.0
        %899 = vmatprep.subr.mxu0 0.0
        %900 = vmatpush1.msra.mxu0 0.0
        %901 = vmatprep.subr.mxu0 0.0
        %902 = vmatpush1.msra.mxu0 0.0
        %903 = vmatprep.subr.mxu0 0.0
        %904 = vmatpush1.msra.mxu0 0.0
        %905 = vmatprep.subr.mxu0 0.0
        %906 = vmatpush1.msra.mxu0 0.0
        %907 = vmatprep.subr.mxu0 0.0
        %908 = vmatpush1.msra.mxu0 0.0
        %909 = vmatprep.subr.mxu0 0.0
        %910 = vmatpush1.msra.mxu0 0.0
        %911 = vmatprep.subr.mxu0 0.0
        %912 = vmatpush1.msra.mxu0 0.0
        %913 = vmatprep.subr.mxu0 0.0
        %914 = vmatpush1.msra.mxu0 0.0
        %915 = vmatprep.subr.mxu0 0.0
        %916 = vmatpush1.msra.mxu0 0.0
        %917 = vmatprep.subr.mxu0 0.0
        %918 = vmatpush1.msra.mxu0 0.0
        %919 = vmatprep.subr.mxu0 0.0
        %920 = vmatpush1.msra.mxu0 0.0
        %921 = vmatprep.subr.mxu0 0.0
        %922 = vmatpush1.msra.mxu0 0.0
        %923 = vmatprep.mubr.f32.mxu0 0.0
        %v924 = vand.u32 %v308, 4294901760
        %925 = vmatmul.mubr.f32.gmra.mrb[0].mxu0 %v924
        %v926 = vpop.f32.mrb[0].mxu0
        %v927 = vadd.f32 %v808, %v926
        %v928 = vpop.f32.mrb[0].mxu0
        %929 = vdwg.mxu0
        %930 = vmatprep.subr.mxu0 0.0
        %v931 = vand.u32 %v360, 4294901760
        %932 = vmatpush1.msra.mxu0 %v931
        %933 = vmatprep.subr.mxu0 0.0
        %v934 = vand.u32 %v361, 4294901760
        %935 = vmatpush1.msra.mxu0 %v934
        %936 = vmatprep.subr.mxu0 0.0
        %v937 = vand.u32 %v362, 4294901760
        %938 = vmatpush1.msra.mxu0 %v937
        %939 = vmatprep.subr.mxu0 0.0
        %v940 = vand.u32 %v363, 4294901760
        %941 = vmatpush1.msra.mxu0 %v940
        %942 = vmatprep.subr.mxu0 0.0
        %v943 = vand.u32 %v364, 4294901760
        %944 = vmatpush1.msra.mxu0 %v943
        %945 = vmatprep.subr.mxu0 0.0
        %v946 = vand.u32 %v365, 4294901760
        %947 = vmatpush1.msra.mxu0 %v946
        %948 = vmatprep.subr.mxu0 0.0
        %v949 = vand.u32 %v366, 4294901760
        %950 = vmatpush1.msra.mxu0 %v949
        %951 = vmatprep.subr.mxu0 0.0
        %v952 = vand.u32 %v367, 4294901760
        %953 = vmatpush1.msra.mxu0 %v952
        %954 = vmatprep.subr.mxu0 0.0
        %v955 = vand.u32 %v368, 4294901760
        %956 = vmatpush1.msra.mxu0 %v955
        %957 = vmatprep.subr.mxu0 0.0
        %v958 = vand.u32 %v369, 4294901760
        %959 = vmatpush1.msra.mxu0 %v958
        %960 = vmatprep.subr.mxu0 0.0
        %v961 = vand.u32 %v370, 4294901760
        %962 = vmatpush1.msra.mxu0 %v961
        %963 = vmatprep.subr.mxu0 0.0
        %v964 = vand.u32 %v371, 4294901760
        %965 = vmatpush1.msra.mxu0 %v964
        %966 = vmatprep.subr.mxu0 0.0
        %v967 = vand.u32 %v372, 4294901760
        %968 = vmatpush1.msra.mxu0 %v967
        %969 = vmatprep.subr.mxu0 0.0
        %v970 = vand.u32 %v373, 4294901760
        %971 = vmatpush1.msra.mxu0 %v970
        %972 = vmatprep.subr.mxu0 0.0
        %v973 = vand.u32 %v374, 4294901760
        %974 = vmatpush1.msra.mxu0 %v973
        %975 = vmatprep.subr.mxu0 0.0
        %v976 = vand.u32 %v375, 4294901760
        %977 = vmatpush1.msra.mxu0 %v976
        %978 = vmatprep.subr.mxu0 0.0
        %979 = vmatpush1.msra.mxu0 0.0
        %980 = vmatprep.subr.mxu0 0.0
        %981 = vmatpush1.msra.mxu0 0.0
        %982 = vmatprep.subr.mxu0 0.0
        %983 = vmatpush1.msra.mxu0 0.0
        %984 = vmatprep.subr.mxu0 0.0
        %985 = vmatpush1.msra.mxu0 0.0
        %986 = vmatprep.subr.mxu0 0.0
        %987 = vmatpush1.msra.mxu0 0.0
        %988 = vmatprep.subr.mxu0 0.0
        %989 = vmatpush1.msra.mxu0 0.0
        %990 = vmatprep.subr.mxu0 0.0
        %991 = vmatpush1.msra.mxu0 0.0
        %992 = vmatprep.subr.mxu0 0.0
        %993 = vmatpush1.msra.mxu0 0.0
        %994 = vmatprep.subr.mxu0 0.0
        %995 = vmatpush1.msra.mxu0 0.0
        %996 = vmatprep.subr.mxu0 0.0
        %997 = vmatpush1.msra.mxu0 0.0
        %998 = vmatprep.subr.mxu0 0.0
        %999 = vmatpush1.msra.mxu0 0.0
        %1000 = vmatprep.subr.mxu0 0.0
        %1001 = vmatpush1.msra.mxu0 0.0
        %1002 = vmatprep.subr.mxu0 0.0
        %1003 = vmatpush1.msra.mxu0 0.0
        %1004 = vmatprep.subr.mxu0 0.0
        %1005 = vmatpush1.msra.mxu0 0.0
        %1006 = vmatprep.subr.mxu0 0.0
        %1007 = vmatpush1.msra.mxu0 0.0
        %1008 = vmatprep.subr.mxu0 0.0
        %1009 = vmatpush1.msra.mxu0 0.0
        %1010 = vmatprep.mubr.f32.mxu0 0.0
        %v1011 = vand.u32 %v308, 4294901760
        %1012 = vmatmul.mubr.f32.gmra.mrb[0].mxu0 %v1011
        %v1013 = vpop.f32.mrb[0].mxu0
        %v1014 = vadd.f32 %v927, %v1013
        %v1015 = vpop.f32.mrb[0].mxu0
        %1016 = vdwg.mxu0
        %1017 = vadd.xlane.f32.xlu0 %v308
        %v1018 = vpop.xlane.xlu0 %1017
        %vm1019 = vcmp.lt.s32.totalorder %v327, %v310
        %v1020 = vsel %vm1019, 1, 0
        %v1021 = vcvt.s32.f32 %v1020
        %vm1022 = vcmask 64512
        %v1024 = vsel %vm1022, %v1021, 0
        %1026 = vmatprep.subr.mxu0 0.0
        %v1027 = vand.u32 %v1018, 4294901760
        %1028 = vmatpush1.msra.mxu0 %v1027
        %1029 = vmatprep.subr.mxu0 0.0
        %1030 = vmatpush1.msra.mxu0 0.0
        %1031 = vmatprep.subr.mxu0 0.0
        %1032 = vmatpush1.msra.mxu0 0.0
        %1033 = vmatprep.subr.mxu0 0.0
        %1034 = vmatpush1.msra.mxu0 0.0
        %1035 = vmatprep.subr.mxu0 0.0
        %1036 = vmatpush1.msra.mxu0 0.0
        %1037 = vmatprep.subr.mxu0 0.0
        %1038 = vmatpush1.msra.mxu0 0.0
        %1039 = vmatprep.subr.mxu0 0.0
        %1040 = vmatpush1.msra.mxu0 0.0
        %1041 = vmatprep.subr.mxu0 0.0
        %1042 = vmatpush1.msra.mxu0 0.0
        %1043 = vmatprep.subr.mxu0 0.0
        %1044 = vmatpush1.msra.mxu0 0.0
        %1045 = vmatprep.subr.mxu0 0.0
        %1046 = vmatpush1.msra.mxu0 0.0
        %1047 = vmatprep.subr.mxu0 0.0
        %1048 = vmatpush1.msra.mxu0 0.0
        %1049 = vmatprep.subr.mxu0 0.0
        %1050 = vmatpush1.msra.mxu0 0.0
        %1051 = vmatprep.subr.mxu0 0.0
        %1052 = vmatpush1.msra.mxu0 0.0
        %1053 = vmatprep.subr.mxu0 0.0
        %1054 = vmatpush1.msra.mxu0 0.0
        %1055 = vmatprep.subr.mxu0 0.0
        %1056 = vmatpush1.msra.mxu0 0.0
        %1057 = vmatprep.subr.mxu0 0.0
        %1058 = vmatpush1.msra.mxu0 0.0
        %1059 = vmatprep.subr.mxu0 0.0
        %1060 = vmatpush1.msra.mxu0 0.0
        %1061 = vmatprep.subr.mxu0 0.0
        %1062 = vmatpush1.msra.mxu0 0.0
        %1063 = vmatprep.subr.mxu0 0.0
        %1064 = vmatpush1.msra.mxu0 0.0
        %1065 = vmatprep.subr.mxu0 0.0
        %1066 = vmatpush1.msra.mxu0 0.0
        %1067 = vmatprep.subr.mxu0 0.0
        %1068 = vmatpush1.msra.mxu0 0.0
        %1069 = vmatprep.subr.mxu0 0.0
        %1070 = vmatpush1.msra.mxu0 0.0
        %1071 = vmatprep.subr.mxu0 0.0
        %1072 = vmatpush1.msra.mxu0 0.0
        %1073 = vmatprep.subr.mxu0 0.0
        %1074 = vmatpush1.msra.mxu0 0.0
        %1075 = vmatprep.subr.mxu0 0.0
        %1076 = vmatpush1.msra.mxu0 0.0
        %1077 = vmatprep.subr.mxu0 0.0
        %1078 = vmatpush1.msra.mxu0 0.0
        %1079 = vmatprep.subr.mxu0 0.0
        %1080 = vmatpush1.msra.mxu0 0.0
        %1081 = vmatprep.subr.mxu0 0.0
        %1082 = vmatpush1.msra.mxu0 0.0
        %1083 = vmatprep.subr.mxu0 0.0
        %1084 = vmatpush1.msra.mxu0 0.0
        %1085 = vmatprep.subr.mxu0 0.0
        %1086 = vmatpush1.msra.mxu0 0.0
        %1087 = vmatprep.subr.mxu0 0.0
        %1088 = vmatpush1.msra.mxu0 0.0
        %1089 = vmatprep.subr.mxu0 0.0
        %1090 = vmatpush1.msra.mxu0 0.0
        %1091 = vmatprep.mubr.f32.mxu0 0.0
        %v1092 = vand.u32 %v1024, 4294901760
        %v1093 = vsub.f32 %v1024, %v1092
        %v1094 = vand.u32 %v1093, 4294901760
        %v1095 = vsub.f32 %v1093, %v1094
        %v1096 = vand.u32 %v1095, 4294901760
        %1097 = vmatmul.mubr.f32.gmra.mrb[0].mxu0 %v1096
        %v1098 = vpop.f32.mrb[0].mxu0
        %v1099 = vadd.f32 0.0, %v1098
        %v1100 = vpop.f32.mrb[0].mxu0
        %1101 = vdwg.mxu0
        %1102 = vmatprep.subr.mxu0 0.0
        %v1103 = vand.u32 %v1018, 4294901760
        %v1104 = vsub.f32 %v1018, %v1103
        %v1105 = vand.u32 %v1104, 4294901760
        %v1106 = vsub.f32 %v1104, %v1105
        %v1107 = vand.u32 %v1106, 4294901760
        %1108 = vmatpush1.msra.mxu0 %v1107
        %1109 = vmatprep.subr.mxu0 0.0
        %1110 = vmatpush1.msra.mxu0 0.0
        %1111 = vmatprep.subr.mxu0 0.0
        %1112 = vmatpush1.msra.mxu0 0.0
        %1113 = vmatprep.subr.mxu0 0.0
        %1114 = vmatpush1.msra.mxu0 0.0
        %1115 = vmatprep.subr.mxu0 0.0
        %1116 = vmatpush1.msra.mxu0 0.0
        %1117 = vmatprep.subr.mxu0 0.0
        %1118 = vmatpush1.msra.mxu0 0.0
        %1119 = vmatprep.subr.mxu0 0.0
        %1120 = vmatpush1.msra.mxu0 0.0
        %1121 = vmatprep.subr.mxu0 0.0
        %1122 = vmatpush1.msra.mxu0 0.0
        %1123 = vmatprep.subr.mxu0 0.0
        %1124 = vmatpush1.msra.mxu0 0.0
        %1125 = vmatprep.subr.mxu0 0.0
        %1126 = vmatpush1.msra.mxu0 0.0
        %1127 = vmatprep.subr.mxu0 0.0
        %1128 = vmatpush1.msra.mxu0 0.0
        %1129 = vmatprep.subr.mxu0 0.0
        %1130 = vmatpush1.msra.mxu0 0.0
        %1131 = vmatprep.subr.mxu0 0.0
        %1132 = vmatpush1.msra.mxu0 0.0
        %1133 = vmatprep.subr.mxu0 0.0
        %1134 = vmatpush1.msra.mxu0 0.0
        %1135 = vmatprep.subr.mxu0 0.0
        %1136 = vmatpush1.msra.mxu0 0.0
        %1137 = vmatprep.subr.mxu0 0.0
        %1138 = vmatpush1.msra.mxu0 0.0
        %1139 = vmatprep.subr.mxu0 0.0
        %1140 = vmatpush1.msra.mxu0 0.0
        %1141 = vmatprep.subr.mxu0 0.0
        %1142 = vmatpush1.msra.mxu0 0.0
        %1143 = vmatprep.subr.mxu0 0.0
        %1144 = vmatpush1.msra.mxu0 0.0
        %1145 = vmatprep.subr.mxu0 0.0
        %1146 = vmatpush1.msra.mxu0 0.0
        %1147 = vmatprep.subr.mxu0 0.0
        %1148 = vmatpush1.msra.mxu0 0.0
        %1149 = vmatprep.subr.mxu0 0.0
        %1150 = vmatpush1.msra.mxu0 0.0
        %1151 = vmatprep.subr.mxu0 0.0
        %1152 = vmatpush1.msra.mxu0 0.0
        %1153 = vmatprep.subr.mxu0 0.0
        %1154 = vmatpush1.msra.mxu0 0.0
        %1155 = vmatprep.subr.mxu0 0.0
        %1156 = vmatpush1.msra.mxu0 0.0
        %1157 = vmatprep.subr.mxu0 0.0
        %1158 = vmatpush1.msra.mxu0 0.0
        %1159 = vmatprep.subr.mxu0 0.0
        %1160 = vmatpush1.msra.mxu0 0.0
        %1161 = vmatprep.subr.mxu0 0.0
        %1162 = vmatpush1.msra.mxu0 0.0
        %1163 = vmatprep.subr.mxu0 0.0
        %1164 = vmatpush1.msra.mxu0 0.0
        %1165 = vmatprep.subr.mxu0 0.0
        %1166 = vmatpush1.msra.mxu0 0.0
        %1167 = vmatprep.subr.mxu0 0.0
        %1168 = vmatpush1.msra.mxu0 0.0
        %1169 = vmatprep.subr.mxu0 0.0
        %1170 = vmatpush1.msra.mxu0 0.0
        %1171 = vmatprep.mubr.f32.mxu0 0.0
        %v1172 = vand.u32 %v1024, 4294901760
        %1173 = vmatmul.mubr.f32.gmra.mrb[0].mxu0 %v1172
        %v1174 = vpop.f32.mrb[0].mxu0
        %v1175 = vadd.f32 %v1099, %v1174
        %v1176 = vpop.f32.mrb[0].mxu0
        %1177 = vdwg.mxu0
        %1178 = vmatprep.subr.mxu0 0.0
        %v1179 = vand.u32 %v1018, 4294901760
        %v1180 = vsub.f32 %v1018, %v1179
        %1181 = vmatpush1.msra.mxu0 %v1180
        %1182 = vmatprep.subr.mxu0 0.0
        %1183 = vmatpush1.msra.mxu0 0.0
        %1184 = vmatprep.subr.mxu0 0.0
        %1185 = vmatpush1.msra.mxu0 0.0
        %1186 = vmatprep.subr.mxu0 0.0
        %1187 = vmatpush1.msra.mxu0 0.0
        %1188 = vmatprep.subr.mxu0 0.0
        %1189 = vmatpush1.msra.mxu0 0.0
        %1190 = vmatprep.subr.mxu0 0.0
        %1191 = vmatpush1.msra.mxu0 0.0
        %1192 = vmatprep.subr.mxu0 0.0
        %1193 = vmatpush1.msra.mxu0 0.0
        %1194 = vmatprep.subr.mxu0 0.0
        %1195 = vmatpush1.msra.mxu0 0.0
        %1196 = vmatprep.subr.mxu0 0.0
        %1197 = vmatpush1.msra.mxu0 0.0
        %1198 = vmatprep.subr.mxu0 0.0
        %1199 = vmatpush1.msra.mxu0 0.0
        %1200 = vmatprep.subr.mxu0 0.0
        %1201 = vmatpush1.msra.mxu0 0.0
        %1202 = vmatprep.subr.mxu0 0.0
        %1203 = vmatpush1.msra.mxu0 0.0
        %1204 = vmatprep.subr.mxu0 0.0
        %1205 = vmatpush1.msra.mxu0 0.0
        %1206 = vmatprep.subr.mxu0 0.0
        %1207 = vmatpush1.msra.mxu0 0.0
        %1208 = vmatprep.subr.mxu0 0.0
        %1209 = vmatpush1.msra.mxu0 0.0
        %1210 = vmatprep.subr.mxu0 0.0
        %1211 = vmatpush1.msra.mxu0 0.0
        %1212 = vmatprep.subr.mxu0 0.0
        %1213 = vmatpush1.msra.mxu0 0.0
        %1214 = vmatprep.subr.mxu0 0.0
        %1215 = vmatpush1.msra.mxu0 0.0
        %1216 = vmatprep.subr.mxu0 0.0
        %1217 = vmatpush1.msra.mxu0 0.0
        %1218 = vmatprep.subr.mxu0 0.0
        %1219 = vmatpush1.msra.mxu0 0.0
        %1220 = vmatprep.subr.mxu0 0.0
        %1221 = vmatpush1.msra.mxu0 0.0
        %1222 = vmatprep.subr.mxu0 0.0
        %1223 = vmatpush1.msra.mxu0 0.0
        %1224 = vmatprep.subr.mxu0 0.0
        %1225 = vmatpush1.msra.mxu0 0.0
        %1226 = vmatprep.subr.mxu0 0.0
        %1227 = vmatpush1.msra.mxu0 0.0
        %1228 = vmatprep.subr.mxu0 0.0
        %1229 = vmatpush1.msra.mxu0 0.0
        %1230 = vmatprep.subr.mxu0 0.0
        %1231 = vmatpush1.msra.mxu0 0.0
        %1232 = vmatprep.subr.mxu0 0.0
        %1233 = vmatpush1.msra.mxu0 0.0
        %1234 = vmatprep.subr.mxu0 0.0
        %1235 = vmatpush1.msra.mxu0 0.0
        %1236 = vmatprep.subr.mxu0 0.0
        %1237 = vmatpush1.msra.mxu0 0.0
        %1238 = vmatprep.subr.mxu0 0.0
        %1239 = vmatpush1.msra.mxu0 0.0
        %1240 = vmatprep.subr.mxu0 0.0
        %1241 = vmatpush1.msra.mxu0 0.0
        %1242 = vmatprep.subr.mxu0 0.0
        %1243 = vmatpush1.msra.mxu0 0.0
        %1244 = vmatprep.mubr.f32.mxu0 0.0
        %v1245 = vand.u32 %v1024, 4294901760
        %v1246 = vsub.f32 %v1024, %v1245
        %1247 = vmatmul.mubr.f32.gmra.mrb[0].mxu0 %v1246
        %v1248 = vpop.f32.mrb[0].mxu0
        %v1249 = vadd.f32 %v1175, %v1248
        %v1250 = vpop.f32.mrb[0].mxu0
        %1251 = vdwg.mxu0
        %1252 = vmatprep.subr.mxu0 0.0
        %v1253 = vand.u32 %v1018, 4294901760
        %1254 = vmatpush1.msra.mxu0 %v1253
        %1255 = vmatprep.subr.mxu0 0.0
        %1256 = vmatpush1.msra.mxu0 0.0
        %1257 = vmatprep.subr.mxu0 0.0
        %1258 = vmatpush1.msra.mxu0 0.0
        %1259 = vmatprep.subr.mxu0 0.0
        %1260 = vmatpush1.msra.mxu0 0.0
        %1261 = vmatprep.subr.mxu0 0.0
        %1262 = vmatpush1.msra.mxu0 0.0
        %1263 = vmatprep.subr.mxu0 0.0
        %1264 = vmatpush1.msra.mxu0 0.0
        %1265 = vmatprep.subr.mxu0 0.0
        %1266 = vmatpush1.msra.mxu0 0.0
        %1267 = vmatprep.subr.mxu0 0.0
        %1268 = vmatpush1.msra.mxu0 0.0
        %1269 = vmatprep.subr.mxu0 0.0
        %1270 = vmatpush1.msra.mxu0 0.0
        %1271 = vmatprep.subr.mxu0 0.0
        %1272 = vmatpush1.msra.mxu0 0.0
        %1273 = vmatprep.subr.mxu0 0.0
        %1274 = vmatpush1.msra.mxu0 0.0
        %1275 = vmatprep.subr.mxu0 0.0
        %1276 = vmatpush1.msra.mxu0 0.0
        %1277 = vmatprep.subr.mxu0 0.0
        %1278 = vmatpush1.msra.mxu0 0.0
        %1279 = vmatprep.subr.mxu0 0.0
        %1280 = vmatpush1.msra.mxu0 0.0
        %1281 = vmatprep.subr.mxu0 0.0
        %1282 = vmatpush1.msra.mxu0 0.0
        %1283 = vmatprep.subr.mxu0 0.0
        %1284 = vmatpush1.msra.mxu0 0.0
        %1285 = vmatprep.subr.mxu0 0.0
        %1286 = vmatpush1.msra.mxu0 0.0
        %1287 = vmatprep.subr.mxu0 0.0
        %1288 = vmatpush1.msra.mxu0 0.0
        %1289 = vmatprep.subr.mxu0 0.0
        %1290 = vmatpush1.msra.mxu0 0.0
        %1291 = vmatprep.subr.mxu0 0.0
        %1292 = vmatpush1.msra.mxu0 0.0
        %1293 = vmatprep.subr.mxu0 0.0
        %1294 = vmatpush1.msra.mxu0 0.0
        %1295 = vmatprep.subr.mxu0 0.0
        %1296 = vmatpush1.msra.mxu0 0.0
        %1297 = vmatprep.subr.mxu0 0.0
        %1298 = vmatpush1.msra.mxu0 0.0
        %1299 = vmatprep.subr.mxu0 0.0
        %1300 = vmatpush1.msra.mxu0 0.0
        %1301 = vmatprep.subr.mxu0 0.0
        %1302 = vmatpush1.msra.mxu0 0.0
        %1303 = vmatprep.subr.mxu0 0.0
        %1304 = vmatpush1.msra.mxu0 0.0
        %1305 = vmatprep.subr.mxu0 0.0
        %1306 = vmatpush1.msra.mxu0 0.0
        %1307 = vmatprep.subr.mxu0 0.0
        %1308 = vmatpush1.msra.mxu0 0.0
        %1309 = vmatprep.subr.mxu0 0.0
        %1310 = vmatpush1.msra.mxu0 0.0
        %1311 = vmatprep.subr.mxu0 0.0
        %1312 = vmatpush1.msra.mxu0 0.0
        %1313 = vmatprep.subr.mxu0 0.0
        %1314 = vmatpush1.msra.mxu0 0.0
        %1315 = vmatprep.subr.mxu0 0.0
        %1316 = vmatpush1.msra.mxu0 0.0
        %1317 = vmatprep.mubr.f32.mxu0 0.0
        %v1318 = vand.u32 %v1024, 4294901760
        %v1319 = vsub.f32 %v1024, %v1318
        %v1320 = vand.u32 %v1319, 4294901760
        %1321 = vmatmul.mubr.f32.gmra.mrb[0].mxu0 %v1320
        %v1322 = vpop.f32.mrb[0].mxu0
        %v1323 = vadd.f32 %v1249, %v1322
        %v1324 = vpop.f32.mrb[0].mxu0
        %1325 = vdwg.mxu0
        %1326 = vmatprep.subr.mxu0 0.0
        %v1327 = vand.u32 %v1018, 4294901760
        %v1328 = vsub.f32 %v1018, %v1327
        %v1329 = vand.u32 %v1328, 4294901760
        %1330 = vmatpush1.msra.mxu0 %v1329
        %1331 = vmatprep.subr.mxu0 0.0
        %1332 = vmatpush1.msra.mxu0 0.0
        %1333 = vmatprep.subr.mxu0 0.0
        %1334 = vmatpush1.msra.mxu0 0.0
        %1335 = vmatprep.subr.mxu0 0.0
        %1336 = vmatpush1.msra.mxu0 0.0
        %1337 = vmatprep.subr.mxu0 0.0
        %1338 = vmatpush1.msra.mxu0 0.0
        %1339 = vmatprep.subr.mxu0 0.0
        %1340 = vmatpush1.msra.mxu0 0.0
        %1341 = vmatprep.subr.mxu0 0.0
        %1342 = vmatpush1.msra.mxu0 0.0
        %1343 = vmatprep.subr.mxu0 0.0
        %1344 = vmatpush1.msra.mxu0 0.0
        %1345 = vmatprep.subr.mxu0 0.0
        %1346 = vmatpush1.msra.mxu0 0.0
        %1347 = vmatprep.subr.mxu0 0.0
        %1348 = vmatpush1.msra.mxu0 0.0
        %1349 = vmatprep.subr.mxu0 0.0
        %1350 = vmatpush1.msra.mxu0 0.0
        %1351 = vmatprep.subr.mxu0 0.0
        %1352 = vmatpush1.msra.mxu0 0.0
        %1353 = vmatprep.subr.mxu0 0.0
        %1354 = vmatpush1.msra.mxu0 0.0
        %1355 = vmatprep.subr.mxu0 0.0
        %1356 = vmatpush1.msra.mxu0 0.0
        %1357 = vmatprep.subr.mxu0 0.0
        %1358 = vmatpush1.msra.mxu0 0.0
        %1359 = vmatprep.subr.mxu0 0.0
        %1360 = vmatpush1.msra.mxu0 0.0
        %1361 = vmatprep.subr.mxu0 0.0
        %1362 = vmatpush1.msra.mxu0 0.0
        %1363 = vmatprep.subr.mxu0 0.0
        %1364 = vmatpush1.msra.mxu0 0.0
        %1365 = vmatprep.subr.mxu0 0.0
        %1366 = vmatpush1.msra.mxu0 0.0
        %1367 = vmatprep.subr.mxu0 0.0
        %1368 = vmatpush1.msra.mxu0 0.0
        %1369 = vmatprep.subr.mxu0 0.0
        %1370 = vmatpush1.msra.mxu0 0.0
        %1371 = vmatprep.subr.mxu0 0.0
        %1372 = vmatpush1.msra.mxu0 0.0
        %1373 = vmatprep.subr.mxu0 0.0
        %1374 = vmatpush1.msra.mxu0 0.0
        %1375 = vmatprep.subr.mxu0 0.0
        %1376 = vmatpush1.msra.mxu0 0.0
        %1377 = vmatprep.subr.mxu0 0.0
        %1378 = vmatpush1.msra.mxu0 0.0
        %1379 = vmatprep.subr.mxu0 0.0
        %1380 = vmatpush1.msra.mxu0 0.0
        %1381 = vmatprep.subr.mxu0 0.0
        %1382 = vmatpush1.msra.mxu0 0.0
        %1383 = vmatprep.subr.mxu0 0.0
        %1384 = vmatpush1.msra.mxu0 0.0
        %1385 = vmatprep.subr.mxu0 0.0
        %1386 = vmatpush1.msra.mxu0 0.0
        %1387 = vmatprep.subr.mxu0 0.0
        %1388 = vmatpush1.msra.mxu0 0.0
        %1389 = vmatprep.subr.mxu0 0.0
        %1390 = vmatpush1.msra.mxu0 0.0
        %1391 = vmatprep.subr.mxu0 0.0
        %1392 = vmatpush1.msra.mxu0 0.0
        %1393 = vmatprep.mubr.f32.mxu0 0.0
        %v1394 = vand.u32 %v1024, 4294901760
        %1395 = vmatmul.mubr.f32.gmra.mrb[0].mxu0 %v1394
        %v1396 = vpop.f32.mrb[0].mxu0
        %v1397 = vadd.f32 %v1323, %v1396
        %v1398 = vpop.f32.mrb[0].mxu0
        %1399 = vdwg.mxu0
        %1400 = vmatprep.subr.mxu0 0.0
        %v1401 = vand.u32 %v1018, 4294901760
        %1402 = vmatpush1.msra.mxu0 %v1401
        %1403 = vmatprep.subr.mxu0 0.0
        %1404 = vmatpush1.msra.mxu0 0.0
        %1405 = vmatprep.subr.mxu0 0.0
        %1406 = vmatpush1.msra.mxu0 0.0
        %1407 = vmatprep.subr.mxu0 0.0
        %1408 = vmatpush1.msra.mxu0 0.0
        %1409 = vmatprep.subr.mxu0 0.0
        %1410 = vmatpush1.msra.mxu0 0.0
        %1411 = vmatprep.subr.mxu0 0.0
        %1412 = vmatpush1.msra.mxu0 0.0
        %1413 = vmatprep.subr.mxu0 0.0
        %1414 = vmatpush1.msra.mxu0 0.0
        %1415 = vmatprep.subr.mxu0 0.0
        %1416 = vmatpush1.msra.mxu0 0.0
        %1417 = vmatprep.subr.mxu0 0.0
        %1418 = vmatpush1.msra.mxu0 0.0
        %1419 = vmatprep.subr.mxu0 0.0
        %1420 = vmatpush1.msra.mxu0 0.0
        %1421 = vmatprep.subr.mxu0 0.0
        %1422 = vmatpush1.msra.mxu0 0.0
        %1423 = vmatprep.subr.mxu0 0.0
        %1424 = vmatpush1.msra.mxu0 0.0
        %1425 = vmatprep.subr.mxu0 0.0
        %1426 = vmatpush1.msra.mxu0 0.0
        %1427 = vmatprep.subr.mxu0 0.0
        %1428 = vmatpush1.msra.mxu0 0.0
        %1429 = vmatprep.subr.mxu0 0.0
        %1430 = vmatpush1.msra.mxu0 0.0
        %1431 = vmatprep.subr.mxu0 0.0
        %1432 = vmatpush1.msra.mxu0 0.0
        %1433 = vmatprep.subr.mxu0 0.0
        %1434 = vmatpush1.msra.mxu0 0.0
        %1435 = vmatprep.subr.mxu0 0.0
        %1436 = vmatpush1.msra.mxu0 0.0
        %1437 = vmatprep.subr.mxu0 0.0
        %1438 = vmatpush1.msra.mxu0 0.0
        %1439 = vmatprep.subr.mxu0 0.0
        %1440 = vmatpush1.msra.mxu0 0.0
        %1441 = vmatprep.subr.mxu0 0.0
        %1442 = vmatpush1.msra.mxu0 0.0
        %1443 = vmatprep.subr.mxu0 0.0
        %1444 = vmatpush1.msra.mxu0 0.0
        %1445 = vmatprep.subr.mxu0 0.0
        %1446 = vmatpush1.msra.mxu0 0.0
        %1447 = vmatprep.subr.mxu0 0.0
        %1448 = vmatpush1.msra.mxu0 0.0
        %1449 = vmatprep.subr.mxu0 0.0
        %1450 = vmatpush1.msra.mxu0 0.0
        %1451 = vmatprep.subr.mxu0 0.0
        %1452 = vmatpush1.msra.mxu0 0.0
        %1453 = vmatprep.subr.mxu0 0.0
        %1454 = vmatpush1.msra.mxu0 0.0
        %1455 = vmatprep.subr.mxu0 0.0
        %1456 = vmatpush1.msra.mxu0 0.0
        %1457 = vmatprep.subr.mxu0 0.0
        %1458 = vmatpush1.msra.mxu0 0.0
        %1459 = vmatprep.subr.mxu0 0.0
        %1460 = vmatpush1.msra.mxu0 0.0
        %1461 = vmatprep.subr.mxu0 0.0
        %1462 = vmatpush1.msra.mxu0 0.0
        %1463 = vmatprep.subr.mxu0 0.0
        %1464 = vmatpush1.msra.mxu0 0.0
        %1465 = vmatprep.mubr.f32.mxu0 0.0
        %v1466 = vand.u32 %v1024, 4294901760
        %1467 = vmatmul.mubr.f32.gmra.mrb[0].mxu0 %v1466
        %v1468 = vpop.f32.mrb[0].mxu0
        %v1469 = vadd.f32 %v1397, %v1468
        %v1470 = vpop.f32.mrb[0].mxu0
        %1471 = vdwg.mxu0
        %s1472 = sshra.s32 %s41, 7
        %s1473 = sand.u32 %s41, 127
        %s1474 = sadd.s32 %s1472, %s40
        %s1475 = smul.u32 %s1474, 128
        %s1476 = sshra.s32 %s41, 7
        %s1477 = sand.u32 %s41, 127
        %s1478 = sadd.s32 %s1475, %s1477
        %s1479 = sld [smem:[#allocation5 + %s1478]]
        %v1480 = vstv %s1479
        %v1481 = vadd.f32 %v1480, %v1469
        %v1482 = vadd.f32 %v1481, %v1014
        %v1483 = vand.u32 2147483647, %v1482
        %v1484 = vrcp.pop 1.0
        %v1485 = vmul.f32 %v1483, %v1484
        %v1486 = vfloor.f32 %v1485
        %v1487 = vsub.f32 %v1483, %v1486
        %vm1488 = vcmp.eq.f32.partialorder %v1487, 1.0
        %v1489 = vsel %vm1488, 0.0, %v1487
        %v1490 = vand.u32 2147483647, %v1489
        %v1491 = vand.u32 %v1482, 2147483648
        %v1492 = vor.u32 %v1490, %v1491
        %vm1493 = vcmp.ne.f32.partialorder %v1492, 0.0
        %vm1494 = vcmp.lt.f32.partialorder %v1492, 0.0
        %vm1495 = vmand %vm1494, %vm1493
        %v1496 = vadd.f32 %v1492, 1.0
        %v1497 = vsel %vm1495, %v1496, %v1492
        %v1498 = vmul.f32 %v1497, 6.2831855
        %v1499 = vand.u32 2147483647, %v1498
        %vm1500 = vcmp.le.f32.partialorder %v1499, 0.7853982
        %vm1501 = vcmp.lt.s32.totalorder %v1498, 0
        %v1502 = vand.u32 %v1498, 2139095040
        %v1503 = vshrl.u32 %v1502, 23
        %v1504 = vsub.s32 %v1503, 127
        %v1505 = vand.u32 2147483647, %v1498
        %v1506 = vand.u32 %v1505, 8388607
        %v1507 = vor.u32 %v1506, 8388608
        %v1508 = vsub.s32 0, %v1507
        %v1509 = vadd.s32 %v1504, 1
        %vm1510 = vcmp.gt.s32.totalorder %v1509, 0
        %v1511 = vsel %vm1510, %v1509, 0
        %v1512 = vshrl.u32 %v1511, 5
        %v1513 = vand.u32 %v1511, 31
        %v1514 = vsub.s32 32, %v1513
        %v1515 = vshrl.u32 683565275, %v1514
        %v1516 = vshll.u32 683565275, %v1513
        %v1517 = vshrl.u32 2475754826, %v1514
        %v1518 = vor.u32 %v1516, %v1517
        %v1519 = vshll.u32 2475754826, %v1513
        %v1520 = vshrl.u32 2131351028, %v1514
        %v1521 = vor.u32 %v1519, %v1520
        %v1522 = vshll.u32 2131351028, %v1513
        %v1523 = vshrl.u32 2102212464, %v1514
        %v1524 = vor.u32 %v1522, %v1523
        %v1525 = vshll.u32 2102212464, %v1513
        %v1526 = vshrl.u32 920167782, %v1514
        %v1527 = vor.u32 %v1525, %v1526
        %v1528 = vshll.u32 920167782, %v1513
        %v1529 = vshrl.u32 1326507024, %v1514
        %v1530 = vor.u32 %v1528, %v1529
        %vm1531 = vcmp.lt.s32.totalorder %v1512, 1
        %vm1532 = vcmp.lt.s32.totalorder %v1512, 2
        %vm1533 = vcmp.lt.s32.totalorder %v1512, 3
        %vm1534 = vcmp.lt.s32.totalorder %v1512, 4
        %v1535 = vsel %vm1531, %v1515, %v1518
        %v1536 = vsel %vm1534, %v1524, 2102212464
        %v1537 = vsel %vm1533, %v1521, %v1536
        %v1538 = vsel %vm1532, %v1535, %v1537
        %v1539 = vsel %vm1531, %v1518, %v1521
        %v1540 = vsel %vm1534, %v1527, 920167782
        %v1541 = vsel %vm1533, %v1524, %v1540
        %v1542 = vsel %vm1532, %v1539, %v1541
        %v1543 = vsel %vm1531, %v1521, %v1524
        %v1544 = vsel %vm1534, %v1530, 1326507024
        %v1545 = vsel %vm1533, %v1527, %v1544
        %v1546 = vsel %vm1532, %v1543, %v1545
        %v1547 = vshll.u32 %v1507, 8
        %v1548 = vmul.u32.u64.compose %v1547, %v1546
        %v1549 = vextract.low.u32 %v1548
        %v1550 = vextract.high.u32 %v1548
        %v1551 = vmul.u32.u64.compose %v1547, %v1542
        %v1552 = vextract.low.u32 %v1551
        %v1553 = vextract.high.u32 %v1551
        %v1554 = vmul.u32 %v1547, %v1538
        %v1555 = vadd.s32 %v1550, %v1552
        %vm1556 = vc.u32 %v1550, %v1552
        %v1557 = vadd.s32 %v1553, 1
        %v1558 = vsel %vm1556, %v1557, %v1553
        %v1559 = vadd.s32 %v1554, %v1558
        %v1560 = vadd.s32 %v1559, 536870912
        %v1561 = vshrl.u32 %v1560, 30
        %v1562 = vshll.u32 %v1561, 30
        %v1563 = vsub.s32 %v1559, %v1562
        %vm1564 = vcmp.lt.s32.totalorder %v1563, 0
        %v1565 = vsub.s32 0, %v1563
        %v1566 = vsel %vm1564, %v1565, %v1563
        %v1567 = vclz %v1566
        %v1568 = vsub.s32 %v1567, 2
        %vm1569 = vcmp.gt.s32.totalorder 0, %v1568
        %v1570 = vsel %vm1569, 0, %v1568
        %v1571 = vsub.s32 32, %v1570
        %v1572 = vshll.u32 %v1563, %v1570
        %v1573 = vshrl.u32 %v1555, %v1571
        %v1574 = vor.u32 %v1572, %v1573
        %v1575 = vsub.s32 4294967266, %v1570
        %v1576 = vadd.s32 %v1575, 127
        %v1577 = vshll.u32 %v1576, 23
        %v1578 = vor.u32 4788187, %v1577
        %v1579 = vand.u32 2147483647, %v1578
        %v1581 = vcvt.s32.f32 %v1574
        %v1582 = vmul.f32 %v1581, %v1579
        %v1583 = vxor.u32 %v1582, 2147483648
        %v1584 = vsel %vm1501, %v1583, %v1582
        %v1585 = vsub.s32 4, %v1561
        %v1586 = vsel %vm1501, %v1585, %v1561
        %v1587 = vsel %vm1500, %v1498, %v1584
        %v1588 = vsel %vm1500, 0, %v1586
        %v1589 = vcosq.f32.pop %v1587
        %v1590 = vsinq.f32.pop %v1587
        %vm1591 = vweird.f32 %v1498
        %v1592 = vadd.s32 %v1588, 3
        %v1593 = vand.u32 %v1592, 3
        %vm1594 = vcmp.lt.s32.totalorder %v1593, 2
        %vm1595 = vcmp.eq.s32.totalorder %v1593, 0
        %v1596 = vxor.u32 %v1590, 2147483648
        %v1597 = vsel %vm1595, %v1589, %v1596
        %vm1598 = vcmp.eq.s32.totalorder %v1593, 2
        %v1599 = vxor.u32 %v1589, 2147483648
        %v1600 = vsel %vm1598, %v1599, %v1590
        %v1601 = vsel %vm1594, %v1597, %v1600
        %v1602 = vsel %vm1591, nan, %v1601
        %v1603 = vand.u32 2147483647, %v1498
        %vm1604 = vcmp.le.f32.partialorder %v1603, 0.7853982
        %vm1605 = vcmp.lt.s32.totalorder %v1498, 0
        %v1606 = vand.u32 %v1498, 2139095040
        %v1607 = vshrl.u32 %v1606, 23
        %v1608 = vsub.s32 %v1607, 127
        %v1609 = vand.u32 2147483647, %v1498
        %v1610 = vand.u32 %v1609, 8388607
        %v1611 = vor.u32 %v1610, 8388608
        %v1612 = vsub.s32 0, %v1611
        %v1613 = vadd.s32 %v1608, 1
        %vm1614 = vcmp.gt.s32.totalorder %v1613, 0
        %v1615 = vsel %vm1614, %v1613, 0
        %v1616 = vshrl.u32 %v1615, 5
        %v1617 = vand.u32 %v1615, 31
        %v1618 = vsub.s32 32, %v1617
        %v1619 = vshrl.u32 683565275, %v1618
        %v1620 = vshll.u32 683565275, %v1617
        %v1621 = vshrl.u32 2475754826, %v1618
        %v1622 = vor.u32 %v1620, %v1621
        %v1623 = vshll.u32 2475754826, %v1617
        %v1624 = vshrl.u32 2131351028, %v1618
        %v1625 = vor.u32 %v1623, %v1624
        %v1626 = vshll.u32 2131351028, %v1617
        %v1627 = vshrl.u32 2102212464, %v1618
        %v1628 = vor.u32 %v1626, %v1627
        %v1629 = vshll.u32 2102212464, %v1617
        %v1630 = vshrl.u32 920167782, %v1618
        %v1631 = vor.u32 %v1629, %v1630
        %v1632 = vshll.u32 920167782, %v1617
        %v1633 = vshrl.u32 1326507024, %v1618
        %v1634 = vor.u32 %v1632, %v1633
        %vm1635 = vcmp.lt.s32.totalorder %v1616, 1
        %vm1636 = vcmp.lt.s32.totalorder %v1616, 2
        %vm1637 = vcmp.lt.s32.totalorder %v1616, 3
        %vm1638 = vcmp.lt.s32.totalorder %v1616, 4
        %v1639 = vsel %vm1635, %v1619, %v1622
        %v1640 = vsel %vm1638, %v1628, 2102212464
        %v1641 = vsel %vm1637, %v1625, %v1640
        %v1642 = vsel %vm1636, %v1639, %v1641
        %v1643 = vsel %vm1635, %v1622, %v1625
        %v1644 = vsel %vm1638, %v1631, 920167782
        %v1645 = vsel %vm1637, %v1628, %v1644
        %v1646 = vsel %vm1636, %v1643, %v1645
        %v1647 = vsel %vm1635, %v1625, %v1628
        %v1648 = vsel %vm1638, %v1634, 1326507024
        %v1649 = vsel %vm1637, %v1631, %v1648
        %v1650 = vsel %vm1636, %v1647, %v1649
        %v1651 = vshll.u32 %v1611, 8
        %v1652 = vmul.u32.u64.compose %v1651, %v1650
        %v1653 = vextract.low.u32 %v1652
        %v1654 = vextract.high.u32 %v1652
        %v1655 = vmul.u32.u64.compose %v1651, %v1646
        %v1656 = vextract.low.u32 %v1655
        %v1657 = vextract.high.u32 %v1655
        %v1658 = vmul.u32 %v1651, %v1642
        %v1659 = vadd.s32 %v1654, %v1656
        %vm1660 = vc.u32 %v1654, %v1656
        %v1661 = vadd.s32 %v1657, 1
        %v1662 = vsel %vm1660, %v1661, %v1657
        %v1663 = vadd.s32 %v1658, %v1662
        %v1664 = vadd.s32 %v1663, 536870912
        %v1665 = vshrl.u32 %v1664, 30
        %v1666 = vshll.u32 %v1665, 30
        %v1667 = vsub.s32 %v1663, %v1666
        %vm1668 = vcmp.lt.s32.totalorder %v1667, 0
        %v1669 = vsub.s32 0, %v1667
        %v1670 = vsel %vm1668, %v1669, %v1667
        %v1671 = vclz %v1670
        %v1672 = vsub.s32 %v1671, 2
        %vm1673 = vcmp.gt.s32.totalorder 0, %v1672
        %v1674 = vsel %vm1673, 0, %v1672
        %v1675 = vsub.s32 32, %v1674
        %v1676 = vshll.u32 %v1667, %v1674
        %v1677 = vshrl.u32 %v1659, %v1675
        %v1678 = vor.u32 %v1676, %v1677
        %v1679 = vsub.s32 4294967266, %v1674
        %v1680 = vadd.s32 %v1679, 127
        %v1681 = vshll.u32 %v1680, 23
        %v1682 = vor.u32 4788187, %v1681
        %v1683 = vand.u32 2147483647, %v1682
        %v1685 = vcvt.s32.f32 %v1678
        %v1686 = vmul.f32 %v1685, %v1683
        %v1687 = vxor.u32 %v1686, 2147483648
        %v1688 = vsel %vm1605, %v1687, %v1686
        %v1689 = vsub.s32 4, %v1665
        %v1690 = vsel %vm1605, %v1689, %v1665
        %v1691 = vsel %vm1604, %v1498, %v1688
        %v1692 = vsel %vm1604, 0, %v1690
        %v1693 = vcosq.f32.pop %v1691
        %v1694 = vsinq.f32.pop %v1691
        %vm1695 = vweird.f32 %v1498
        %v1696 = vand.u32 %v1692, 3
        %vm1697 = vcmp.lt.s32.totalorder %v1696, 2
        %vm1698 = vcmp.eq.s32.totalorder %v1696, 0
        %v1699 = vxor.u32 %v1694, 2147483648
        %v1700 = vsel %vm1698, %v1693, %v1699
        %vm1701 = vcmp.eq.s32.totalorder %v1696, 2
        %v1702 = vxor.u32 %v1693, 2147483648
        %v1703 = vsel %vm1701, %v1702, %v1694
        %v1704 = vsel %vm1697, %v1700, %v1703
        %v1705 = vsel %vm1695, nan, %v1704
        %vm1706 = vcmp.gt.f32.partialorder %v307, 0.0
        %v1707 = vsel %vm1706, 1, 0
        %v1708 = vcvt.s32.f32 %v1707
        %1709 = vst [vmem:[%s265] sm:$0xff] %v1708
        %v1710 = vmul.f32 %v1708, 0.1
        %v1711 = vmul.f32 %v1708, 0.003
        %v1712 = vsub.f32 1.0, %v1708
        %v1713 = vmul.f32 %v1712, 0.033333335
        %v1714 = vadd.f32 %v1711, %v1713
        %s1715 = smul.u32 %s40, 128
        %s1716 = sld [smem:[#allocation3 + %s1715]]
        %s1717 = sld [smem:[#allocation4 + %s1715]]
        %v1718 = vstv %s1716
        %v1719 = vmul.f32 %v1602, %v1718
        %v1720 = vstv %s1717
        %v1721 = vmul.f32 %v1705, %v1720
        %v1722 = vadd.f32 %v1719, %v1721
        %v1723 = vld [vmem:[%s290] sm:$0xff]
        %v1724 = vmul.f32 %v1714, %v1723
        %v1725 = vmul.f32 %v1722, %v1710
        %v1726 = vadd.f32 %v1725, %v1724
        %1727 = vst [vmem:[%s298] sm:$0xff] %v1726
        %1728 = vst [vmem:[%s306] sm:$0xff] %v1724
        %v1729 = vmul.f32 %v1602, %v1705
        %v1730 = vadd.f32 %v1729, %v1729
        %v1731 = vmul.f32 %v1705, %v1705
        %v1732 = vmul.f32 %v1602, %v1602
        %v1733 = vsub.f32 %v1731, %v1732
        %s1734 = sadd.s32 %s1715, 1
        %s1735 = sld [smem:[#allocation3 + %s1734]]
        %s1736 = sld [smem:[#allocation4 + %s1734]]
        %v1737 = vstv %s1735
        %v1738 = vmul.f32 %v1730, %v1737
        %v1739 = vstv %s1736
        %v1740 = vmul.f32 %v1733, %v1739
        %v1741 = vadd.f32 %v1738, %v1740
        %s1742 = scalar_lea.vmem %s290, 8
        %v1743 = vld [vmem:[%s1742] sm:$0xff]
        %v1744 = vmul.f32 %v1714, %v1743
        %v1745 = vmul.f32 %v1741, %v1710
        %v1746 = vadd.f32 %v1745, %v1744
        %s1747 = scalar_lea.vmem %s298, 8
        %1748 = vst [vmem:[%s1747] sm:$0xff] %v1746
        %s1749 = scalar_lea.vmem %s306, 8
        %1750 = vst [vmem:[%s1749] sm:$0xff] %v1744
        %v1751 = vmul.f32 %v1730, %v1705
        %v1752 = vmul.f32 %v1733, %v1602
        %v1753 = vadd.f32 %v1751, %v1752
        %v1754 = vmul.f32 %v1733, %v1705
        %v1755 = vmul.f32 %v1730, %v1602
        %v1756 = vsub.f32 %v1754, %v1755
        %s1757 = sadd.s32 %s1715, 2
        %s1758 = sld [smem:[#allocation3 + %s1757]]
        %s1759 = sld [smem:[#allocation4 + %s1757]]
        %v1760 = vstv %s1758
        %v1761 = vmul.f32 %v1753, %v1760
        %v1762 = vstv %s1759
        %v1763 = vmul.f32 %v1756, %v1762
        %v1764 = vadd.f32 %v1761, %v1763
        %s1765 = scalar_lea.vmem %s290, 16
        %v1766 = vld [vmem:[%s1765] sm:$0xff]
        %v1767 = vmul.f32 %v1714, %v1766
        %v1768 = vmul.f32 %v1764, %v1710
        %v1769 = vadd.f32 %v1768, %v1767
        %s1770 = scalar_lea.vmem %s298, 16
        %1771 = vst [vmem:[%s1770] sm:$0xff] %v1769
        %s1772 = scalar_lea.vmem %s306, 16
        %1773 = vst [vmem:[%s1772] sm:$0xff] %v1767
        %v1774 = vmul.f32 %v1753, %v1705
        %v1775 = vmul.f32 %v1756, %v1602
        %v1776 = vadd.f32 %v1774, %v1775
        %v1777 = vmul.f32 %v1756, %v1705
        %v1778 = vmul.f32 %v1753, %v1602
        %v1779 = vsub.f32 %v1777, %v1778
        %s1780 = sadd.s32 %s1715, 3
        %s1781 = sld [smem:[#allocation3 + %s1780]]
        %s1782 = sld [smem:[#allocation4 + %s1780]]
        %v1783 = vstv %s1781
        %v1784 = vmul.f32 %v1776, %v1783
        %v1785 = vstv %s1782
        %v1786 = vmul.f32 %v1779, %v1785
        %v1787 = vadd.f32 %v1784, %v1786
        %s1788 = scalar_lea.vmem %s290, 24
        %v1789 = vld [vmem:[%s1788] sm:$0xff]
        %v1790 = vmul.f32 %v1714, %v1789
        %v1791 = vmul.f32 %v1787, %v1710
        %v1792 = vadd.f32 %v1791, %v1790
        %s1793 = scalar_lea.vmem %s298, 24
        %1794 = vst [vmem:[%s1793] sm:$0xff] %v1792
        %s1795 = scalar_lea.vmem %s306, 24
        %1796 = vst [vmem:[%s1795] sm:$0xff] %v1790
        %v1797 = vmul.f32 %v1776, %v1705
        %v1798 = vmul.f32 %v1779, %v1602
        %v1799 = vadd.f32 %v1797, %v1798
        %v1800 = vmul.f32 %v1779, %v1705
        %v1801 = vmul.f32 %v1776, %v1602
        %v1802 = vsub.f32 %v1800, %v1801
        %s1803 = sadd.s32 %s1715, 4
        %s1804 = sld [smem:[#allocation3 + %s1803]]
        %s1805 = sld [smem:[#allocation4 + %s1803]]
        %v1806 = vstv %s1804
        %v1807 = vmul.f32 %v1799, %v1806
        %v1808 = vstv %s1805
        %v1809 = vmul.f32 %v1802, %v1808
        %v1810 = vadd.f32 %v1807, %v1809
        %s1811 = scalar_lea.vmem %s290, 32
        %v1812 = vld [vmem:[%s1811] sm:$0xff]
        %v1813 = vmul.f32 %v1714, %v1812
        %v1814 = vmul.f32 %v1810, %v1710
        %v1815 = vadd.f32 %v1814, %v1813
        %s1816 = scalar_lea.vmem %s298, 32
        %1817 = vst [vmem:[%s1816] sm:$0xff] %v1815
        %s1818 = scalar_lea.vmem %s306, 32
        %1819 = vst [vmem:[%s1818] sm:$0xff] %v1813
        %v1820 = vmul.f32 %v1799, %v1705
        %v1821 = vmul.f32 %v1802, %v1602
        %v1822 = vadd.f32 %v1820, %v1821
        %v1823 = vmul.f32 %v1802, %v1705
        %v1824 = vmul.f32 %v1799, %v1602
        %v1825 = vsub.f32 %v1823, %v1824
        %s1826 = sadd.s32 %s1715, 5
        %s1827 = sld [smem:[#allocation3 + %s1826]]
        %s1828 = sld [smem:[#allocation4 + %s1826]]
        %v1829 = vstv %s1827
        %v1830 = vmul.f32 %v1822, %v1829
        %v1831 = vstv %s1828
        %v1832 = vmul.f32 %v1825, %v1831
        %v1833 = vadd.f32 %v1830, %v1832
        %s1834 = scalar_lea.vmem %s290, 40
        %v1835 = vld [vmem:[%s1834] sm:$0xff]
        %v1836 = vmul.f32 %v1714, %v1835
        %v1837 = vmul.f32 %v1833, %v1710
        %v1838 = vadd.f32 %v1837, %v1836
        %s1839 = scalar_lea.vmem %s298, 40
        %1840 = vst [vmem:[%s1839] sm:$0xff] %v1838
        %s1841 = scalar_lea.vmem %s306, 40
        %1842 = vst [vmem:[%s1841] sm:$0xff] %v1836
        %v1843 = vmul.f32 %v1822, %v1705
        %v1844 = vmul.f32 %v1825, %v1602
        %v1845 = vadd.f32 %v1843, %v1844
        %v1846 = vmul.f32 %v1825, %v1705
        %v1847 = vmul.f32 %v1822, %v1602
        %v1848 = vsub.f32 %v1846, %v1847
        %s1849 = sadd.s32 %s1715, 6
        %s1850 = sld [smem:[#allocation3 + %s1849]]
        %s1851 = sld [smem:[#allocation4 + %s1849]]
        %v1852 = vstv %s1850
        %v1853 = vmul.f32 %v1845, %v1852
        %v1854 = vstv %s1851
        %v1855 = vmul.f32 %v1848, %v1854
        %v1856 = vadd.f32 %v1853, %v1855
        %s1857 = scalar_lea.vmem %s290, 48
        %v1858 = vld [vmem:[%s1857] sm:$0xff]
        %v1859 = vmul.f32 %v1714, %v1858
        %v1860 = vmul.f32 %v1856, %v1710
        %v1861 = vadd.f32 %v1860, %v1859
        %s1862 = scalar_lea.vmem %s298, 48
        %1863 = vst [vmem:[%s1862] sm:$0xff] %v1861
        %s1864 = scalar_lea.vmem %s306, 48
        %1865 = vst [vmem:[%s1864] sm:$0xff] %v1859
        %v1866 = vmul.f32 %v1845, %v1705
        %v1867 = vmul.f32 %v1848, %v1602
        %v1868 = vadd.f32 %v1866, %v1867
        %v1869 = vmul.f32 %v1848, %v1705
        %v1870 = vmul.f32 %v1845, %v1602
        %v1871 = vsub.f32 %v1869, %v1870
        %s1872 = sadd.s32 %s1715, 7
        %s1873 = sld [smem:[#allocation3 + %s1872]]
        %s1874 = sld [smem:[#allocation4 + %s1872]]
        %v1875 = vstv %s1873
        %v1876 = vmul.f32 %v1868, %v1875
        %v1877 = vstv %s1874
        %v1878 = vmul.f32 %v1871, %v1877
        %v1879 = vadd.f32 %v1876, %v1878
        %s1880 = scalar_lea.vmem %s290, 56
        %v1881 = vld [vmem:[%s1880] sm:$0xff]
        %v1882 = vmul.f32 %v1714, %v1881
        %v1883 = vmul.f32 %v1879, %v1710
        %v1884 = vadd.f32 %v1883, %v1882
        %s1885 = scalar_lea.vmem %s298, 56
        %1886 = vst [vmem:[%s1885] sm:$0xff] %v1884
        %s1887 = scalar_lea.vmem %s306, 56
        %1888 = vst [vmem:[%s1887] sm:$0xff] %v1882
        %v1889 = vmul.f32 %v1868, %v1705
        %v1890 = vmul.f32 %v1871, %v1602
        %v1891 = vadd.f32 %v1889, %v1890
        %v1892 = vmul.f32 %v1871, %v1705
        %v1893 = vmul.f32 %v1868, %v1602
        %v1894 = vsub.f32 %v1892, %v1893
        %s1895 = sadd.s32 %s1715, 8
        %s1896 = sld [smem:[#allocation3 + %s1895]]
        %s1897 = sld [smem:[#allocation4 + %s1895]]
        %v1898 = vstv %s1896
        %v1899 = vmul.f32 %v1891, %v1898
        %v1900 = vstv %s1897
        %v1901 = vmul.f32 %v1894, %v1900
        %v1902 = vadd.f32 %v1899, %v1901
        %s1903 = scalar_lea.vmem %s290, 64
        %v1904 = vld [vmem:[%s1903] sm:$0xff]
        %v1905 = vmul.f32 %v1714, %v1904
        %v1906 = vmul.f32 %v1902, %v1710
        %v1907 = vadd.f32 %v1906, %v1905
        %s1908 = scalar_lea.vmem %s298, 64
        %1909 = vst [vmem:[%s1908] sm:$0xff] %v1907
        %s1910 = scalar_lea.vmem %s306, 64
        %1911 = vst [vmem:[%s1910] sm:$0xff] %v1905
        %p1912 = scmp.lt.s32.totalorder %s40, 1
        %s1913 = scalar_select %p1912, %s40, 1
        %p1914 = scmp.lt.s32.totalorder %s41, 0
        %s1915 = scalar_select %p1914, %s41, 0
        %s1916 = smul.addr %s1913, 9
        %s1917 = sadd.s32 %s1915, %s1916
        %s1918 = smul.addr %s1917, 8
        %s1919 = scalar_lea.vmem %s5, %s1918
        %s1920 = sand.u32 %s142, 1
        %s1921 = scalar_lea.sflag [#allocation7], %s1920
        %s1922 = sand.u32 %s142, 1
        %s1923 = smul.addr %s1922, 8
        %s1924 = scalar_lea.vmem [#allocation6], %s1923
        %p1925 = scmp.lt.s32.totalorder %s40, 1
        %s1926 = scalar_select %p1925, %s40, 1
        %p1927 = scmp.lt.s32.totalorder %s41, 0
        %s1928 = scalar_select %p1927, %s41, 0
        %s1929 = smul.addr %s1926, 9
        %s1930 = sadd.s32 %s1928, %s1929
        %s1931 = smul.addr %s1930, 8
        %s1932 = scalar_lea.vmem %s7, %s1931
        // Predicated region
        $region29: #{sine_gen.3} parent=27 // pred_check
          %p1933 = pneg %p124
        $region30: #{sine_gen.3} parent=27 // pred_check_branch
          %1935 = sbr.rel (%p1933) target = $region32
        $region31: #{sine_gen.3} parent=27 // pred_region
          _
        $region32: #{sine_gen.3} parent=27 // pred_fallthru
          _
        // Predicated region
        $region33: #{sine_gen.3} parent=27 // pred_check
          %p1936 = pneg %p152
        $region34: #{sine_gen.3} parent=27 // pred_check_branch
          %1938 = sbr.rel (%p1936) target = $region36
        $region35: #{sine_gen.3} parent=27 // pred_region
          %s1940 = ssub.s32 128, 128
          %1941 = vsyncadd %s1921, %s1940
          %s1942 = sadd.s32 %s41, %s40
          %s1943 = smul.addr %s1942, 128
          %s1944 = scalar_lea.hbm %s6, %s1943
          %s1946 = sshll.u32 %s1924, 4
          %s1947 = int_to_ptr.vmem [resolvable:$true] %s1946
          %1949 = dma.vmem_to_hbm [thread:$0]  %s1947, 128, %s1944, %s1921
        $region36: #{sine_gen.3} parent=27 // pred_fallthru
          _
        // Predicated region
        $region37: #{sine_gen.3} parent=27 // pred_check
          %p1950 = pneg %p180
        $region38: #{sine_gen.3} parent=27 // pred_check_branch
          %1952 = sbr.rel (%p1950) target = $region40
        $region39: #{sine_gen.3} parent=27 // pred_region
          _
        $region40: #{sine_gen.3} parent=27 // pred_fallthru
          _
      $region28: #{sine_gen.3} parent=5 // pred_fallthru
        _
      %p1953 = scmp.le.s32.totalorder 2, %s31
      // Predicated region
      $region41: #{sine_gen.3} parent=5 // pred_check
        %p1954 = pneg %p1953
      $region42: #{sine_gen.3} parent=5 // pred_check_branch
        %1956 = sbr.rel (%p1954) target = $region44
      $region43: #{sine_gen.3} parent=5 // pred_region
        %s1957 = ssub.s32 %s31, 2
        // Predicated region
        $region45: #{sine_gen.3} parent=43 // pred_check
          %p1958 = pneg %p130
        $region46: #{sine_gen.3} parent=43 // pred_check_branch
          %1960 = sbr.rel (%p1958) target = $region48
        $region47: #{sine_gen.3} parent=43 // pred_region
          %p1961 = scmp.lt.s32.totalorder %s42, 1
          %s1962 = scalar_select %p1961, %s42, 1
          %p1963 = scmp.lt.s32.totalorder %s43, 0
          %s1964 = scalar_select %p1963, %s43, 0
          %s1965 = smul.addr %s1962, 9
          %s1966 = sadd.s32 %s1964, %s1965
          %s1967 = smul.addr %s1966, 8
          %s1968 = scalar_lea.vmem %s5, %s1967
        $region48: #{sine_gen.3} parent=43 // pred_fallthru
          _
        // Predicated region
        $region49: #{sine_gen.3} parent=43 // pred_check
          %p1969 = pneg %p158
        $region50: #{sine_gen.3} parent=43 // pred_check_branch
          %1971 = sbr.rel (%p1969) target = $region52
        $region51: #{sine_gen.3} parent=43 // pred_region
          %s1972 = sand.u32 %s143, 1
          %s1973 = scalar_lea.sflag [#allocation7], %s1972
          %s1974 = sand.u32 %s143, 1
          %s1975 = smul.addr %s1974, 8
          %s1976 = scalar_lea.vmem [#allocation6], %s1975
          %1977 = dma.done %s1973, 128
        $region52: #{sine_gen.3} parent=43 // pred_fallthru
          _
        // Predicated region
        $region53: #{sine_gen.3} parent=43 // pred_check
          %p1978 = pneg %p186
        $region54: #{sine_gen.3} parent=43 // pred_check_branch
          %1980 = sbr.rel (%p1978) target = $region56
        $region55: #{sine_gen.3} parent=43 // pred_region
          %p1981 = scmp.lt.s32.totalorder %s42, 1
          %s1982 = scalar_select %p1981, %s42, 1
          %p1983 = scmp.lt.s32.totalorder %s43, 0
          %s1984 = scalar_select %p1983, %s43, 0
          %s1985 = smul.addr %s1982, 9
          %s1986 = sadd.s32 %s1984, %s1985
          %s1987 = smul.addr %s1986, 8
          %s1988 = scalar_lea.vmem %s7, %s1987
        $region56: #{sine_gen.3} parent=43 // pred_fallthru
          _
      $region44: #{sine_gen.3} parent=5 // pred_fallthru
        _
    $region6: #{sine_gen.3} parent=1 // loop_footer
      %s35 = sadd.s32 1, %s31
    $region7: #{sine_gen.3} parent=1 // loop_footer_branch
      %30 = sbr.rel target = $region3
    $region8: #{sine_gen.3} parent=1 // loop_exit
      _
    %1989 = vsyncpa [#allocation7], 1
    %s1990 = scalar_lea.sflag [#allocation7], 1
    %1991 = vsyncpa %s1990, 1

</llo_original>
